<compile_context>
chip_gen: v7x
topology: tpu7x:2x2x1
jax: 0.10.0
libtpu: 0.0.40
codegen_flags: <defaults>
</compile_context>

<pallas_src>
import functools
import math

import jax
import jax.numpy as jnp
import numpy as np
from jax.experimental import pallas as pl
from jax.experimental.pallas import tpu as pltpu


def pad_size(kernel):
    return int(np.floor(kernel / 2))


def _round_up(x, m):
    return ((x + m - 1) // m) * m


def _phase_decompose_weights(weight_oihw, *, scale, kernel_size, pad):
    """Collapse the KxK conv-on-upsampled-input into per-output-phase weights over
    a common FxF offset window on the ORIGINAL input grid.

    For output pixel (S*ih + ph, S*iw + pw) the conv only touches original pixels
    x[ih + d, iw + e] with d = floor((ph + kh - pad)/S), e = floor((pw + kw - pad)/S).
    """
    K, S = kernel_size, scale
    offs = np.array([[(p + k - pad) // S for k in range(K)] for p in range(S)])
    dmin, dmax = int(offs.min()), int(offs.max())
    F = dmax - dmin + 1
    # M[p, k, a] = 1 iff kernel tap k of phase p lands on window offset (dmin + a).
    M = np.zeros((S, K, F), np.float32)
    for p in range(S):
        for k in range(K):
            M[p, k, offs[p, k] - dmin] = 1.0
    M = jnp.asarray(M)
    # w_phase[a, b, ph, pw, co, ci] = sum over (kh, kw) that map to offsets (a, b).
    wph = jnp.einsum("ocij,pia,rjb->abproc", weight_oihw, M, M)
    return wph, dmin, dmax, F


def _decoder_phase_conv_kernel(x_ref, w_ref, b_ref, o_ref, *, tap_starts, chunk):
    """Fused upsample+pad+conv (phase-decomposed) for all batches at once.

    x_ref : (Cin, Lbuf)  bf16  flattened zero-padded input planes (batch folded
                               into the lane axis, + halo tail so all tap slices
                               stay in bounds)
    w_ref : (T, Q, Cin)  bf16  phase-collapsed weights, T = F*F taps,
                               Q = scale^2 * Cout phase-major output channels
    b_ref : (Q, 1)       f32   bias (broadcast over lanes)
    o_ref : (Q, CH)      f32   CH is a multiple of 128 -> unmasked lane-dense store
    """
    acc = None
    for t, start in enumerate(tap_starts):          # static unroll over F*F taps
        rhs = x_ref[:, start:start + chunk]         # shifted slice straight from VMEM
        part = jnp.dot(w_ref[t], rhs, preferred_element_type=jnp.float32)
        acc = part if acc is None else acc + part
    o_ref[...] = acc + b_ref[...]                   # fold bias, single f32 store


def decoder_forward(x_nchw, weight_oihw, bias, *, scale, kernel_size,
                    compute_dtype=jnp.bfloat16):
    """x_nchw: (N, Cin, H, W) f32.  Returns (N, Cout, H*scale, W*scale) (NCHW)."""
    K, S = kernel_size, scale
    # padding = K//2 only reproduces PyTorch 'same'-size Conv2d for odd K
    assert K % 2 == 1, "Decoder kernel assumes odd kernel_size (PyTorch padding=K//2)"
    pad = pad_size(K)
    N, Cin, H, W = x_nchw.shape
    Cout = weight_oihw.shape[0]
    Ho, Wo = H * S, W * S
    Q = S * S * Cout                                  # phase-major output channels

    # ---- phase-collapsed weights / bias (tiny, plain JAX) --------------------
    wph, dmin, dmax, F = _phase_decompose_weights(
        weight_oihw, scale=S, kernel_size=K, pad=pad)
    wt = wph.reshape(F * F, Q, Cin).astype(compute_dtype)       # (T, Q, Cin)
    bq = jnp.tile(bias, S * S).reshape(Q, 1).astype(jnp.float32)

    # ---- input: halo-pad the ORIGINAL x and flatten (no upsample, no im2col) --
    pad_lo, pad_hi = -dmin, dmax                      # pad_lo + pad_hi = F - 1
    Hp, Wp = H + F - 1, W + F - 1
    L = Hp * Wp                                       # per-batch flat plane length
    CH = _round_up(N * L, 128)                        # lane-dense output width
    start_max = (F - 1) * (Wp + 1)                    # largest tap start offset
    Lbuf = CH + start_max                             # input flat length (+ tail)

    xp = jnp.pad(x_nchw.astype(compute_dtype),
                 ((0, 0), (0, 0), (pad_lo, pad_hi), (pad_lo, pad_hi)))
    # (N, Cin, Hp, Wp) -> (Cin, N*L): batch folded into the lane axis so a single
    # matmul chain / single weight push covers every batch element (v5e/v6e).
    x_flat = jnp.transpose(xp, (1, 0, 2, 3)).reshape(Cin, N * L)
    x_flat = jnp.pad(x_flat, ((0, 0), (0, Lbuf - N * L)))

    tap_starts = tuple(a * Wp + b for a in range(F) for b in range(F))

    # ---- cost estimate / VMEM sizing from static shapes -----------------------
    esize = jnp.dtype(compute_dtype).itemsize
    in_bytes = Cin * Lbuf * esize + F * F * Q * Cin * esize + Q * 4
    out_bytes = Q * CH * 4
    flops = 2 * F * F * Q * Cin * CH
    vmem_limit = int(max(4 * (in_bytes + out_bytes) + (1 << 20), 16 * 1024 * 1024))

    kernel = functools.partial(_decoder_phase_conv_kernel,
                               tap_starts=tap_starts, chunk=CH)
    out = pl.pallas_call(
        kernel,
        out_shape=jax.ShapeDtypeStruct((Q, CH), jnp.float32),
        # single invocation, whole (small) operands resident in VMEM
        in_specs=[pl.BlockSpec(memory_space=pltpu.MemorySpace.VMEM)] * 3,
        out_specs=pl.BlockSpec(memory_space=pltpu.MemorySpace.VMEM),
        compiler_params=pltpu.CompilerParams(vmem_limit_bytes=vmem_limit),
        cost_estimate=pl.CostEstimate(flops=flops, transcendentals=0,
                                      bytes_accessed=in_bytes + out_bytes),
    )(x_flat, wt, bq)

    # ---- drop junk lanes + interleave phases back to NCHW (one output pass) ---
    y = out[:, :N * L].reshape(S, S, Cout, N, Hp, Wp)[..., :H, :W]
    y = jnp.transpose(y, (3, 2, 4, 0, 5, 1)).reshape(N, Cout, Ho, Wo)
    return y.astype(x_nchw.dtype)


def init_decoder_params(key, depth_in, depth_out, kernel_size):
    """Deterministic synthetic init matching the PyTorch module's shapes.
    Weight: xavier_normal_ over OIHW (Cout, Cin, K, K); bias: Conv2d default."""
    kw, kb = jax.random.split(key)
    fan_in = depth_in * kernel_size * kernel_size
    fan_out = depth_out * kernel_size * kernel_size
    std = math.sqrt(2.0 / (fan_in + fan_out))
    weight = std * jax.random.normal(
        kw, (depth_out, depth_in, kernel_size, kernel_size), dtype=jnp.float32)
    bound = 1.0 / math.sqrt(fan_in)
    bias = jax.random.uniform(kb, (depth_out,), jnp.float32, -bound, bound)
    return weight, bias


def _reference(x_nchw, weight_oihw, bias, *, scale, kernel_size):
    """Pure-JAX f32 reference (nearest upsample + conv) for correctness check."""
    pad = pad_size(kernel_size)
    x_up = jnp.repeat(jnp.repeat(x_nchw, scale, axis=2), scale, axis=3)
    out = jax.lax.conv_general_dilated(
        x_up, weight_oihw,
        window_strides=(1, 1),
        padding=((pad, pad), (pad, pad)),
        dimension_numbers=("NCHW", "OIHW", "NCHW"),
    )
    return out + bias.reshape(1, -1, 1, 1)


if __name__ == "__main__":
    # Shapes consistent with the module: Decoder(depth_in=4, depth_out=8,
    # kernel_size=3, scale=2) applied to x of shape (2, 4, 16, 16).
    N, Cin, H, W = 2, 4, 16, 16
    Cout, K, SCALE = 8, 3, 2

    key = jax.random.PRNGKey(0)
    kx, kp = jax.random.split(key)
    x = jax.random.normal(kx, (N, Cin, H, W), dtype=jnp.float32)
    weight, bias = init_decoder_params(kp, Cin, Cout, K)

    fwd = jax.jit(functools.partial(decoder_forward, scale=SCALE, kernel_size=K))
    out = jax.block_until_ready(fwd(x, weight, bias))
    ref = jax.block_until_ready(
        _reference(x, weight, bias, scale=SCALE, kernel_size=K))

    assert out.shape == (N, Cout, H * SCALE, W * SCALE), out.shape
    # bf16 MXU operands (per perf review) with f32 accumulation -> bf16-level tolerance
    # vs. the pure-f32 PyTorch-equivalent reference.
    np.testing.assert_allclose(np.asarray(out), np.asarray(ref),
                               rtol=2e-2, atol=5e-2)
    print("KERNEL_OK")
</pallas_src>

<mosaic_0001>
module attributes {stable_mosaic.version = 11 : i64} {
  func.func @_decoder_phase_conv_kernel(%arg0: memref<4x806xbf16, #tpu.memory_space<vmem>>, %arg1: memref<9x32x4xbf16, #tpu.memory_space<vmem>>, %arg2: memref<32x1xf32, #tpu.memory_space<vmem>>, %arg3: memref<32x768xf32, #tpu.memory_space<vmem>>) attributes {dimension_semantics = [], scalar_prefetch = 0 : i64, scratch_operands = 0 : i64, tpu.core_type = #tpu.core_type<tc>} {
    %c0 = arith.constant 0 : index
    %c0_0 = arith.constant 0 : index
    %0 = vector.load %arg0[%c0, %c0_0] : memref<4x806xbf16, #tpu.memory_space<vmem>>, vector<4x768xbf16>
    %c0_1 = arith.constant 0 : index
    %c0_2 = arith.constant 0 : index
    %c0_3 = arith.constant 0 : index
    %1 = vector.load %arg1[%c0_1, %c0_2, %c0_3] : memref<9x32x4xbf16, #tpu.memory_space<vmem>>, vector<1x32x4xbf16>
    %2 = vector.shape_cast %1 : vector<1x32x4xbf16> to vector<32x4xbf16>
    %cst = arith.constant dense<0.000000e+00> : vector<32x768xf32>
    %3 = tpu.matmul %2, %0, %cst {dimension_numbers = #tpu.dot_dimension_numbers<[1], [0], [0], [1], [0, 0, 1, 1], [], []>} : vector<32x4xbf16>, vector<4x768xbf16>, vector<32x768xf32> -> vector<32x768xf32>
    %c0_4 = arith.constant 0 : index
    %c1 = arith.constant 1 : index
    %4 = vector.load %arg0[%c0_4, %c1] : memref<4x806xbf16, #tpu.memory_space<vmem>>, vector<4x768xbf16>
    %c1_5 = arith.constant 1 : index
    %c0_6 = arith.constant 0 : index
    %c0_7 = arith.constant 0 : index
    %5 = vector.load %arg1[%c1_5, %c0_6, %c0_7] : memref<9x32x4xbf16, #tpu.memory_space<vmem>>, vector<1x32x4xbf16>
    %6 = vector.shape_cast %5 : vector<1x32x4xbf16> to vector<32x4xbf16>
    %cst_8 = arith.constant dense<0.000000e+00> : vector<32x768xf32>
    %7 = tpu.matmul %6, %4, %cst_8 {dimension_numbers = #tpu.dot_dimension_numbers<[1], [0], [0], [1], [0, 0, 1, 1], [], []>} : vector<32x4xbf16>, vector<4x768xbf16>, vector<32x768xf32> -> vector<32x768xf32>
    %8 = arith.addf %3, %7 : vector<32x768xf32>
    %c0_9 = arith.constant 0 : index
    %c2 = arith.constant 2 : index
    %9 = vector.load %arg0[%c0_9, %c2] : memref<4x806xbf16, #tpu.memory_space<vmem>>, vector<4x768xbf16>
    %c2_10 = arith.constant 2 : index
    %c0_11 = arith.constant 0 : index
    %c0_12 = arith.constant 0 : index
    %10 = vector.load %arg1[%c2_10, %c0_11, %c0_12] : memref<9x32x4xbf16, #tpu.memory_space<vmem>>, vector<1x32x4xbf16>
    %11 = vector.shape_cast %10 : vector<1x32x4xbf16> to vector<32x4xbf16>
    %cst_13 = arith.constant dense<0.000000e+00> : vector<32x768xf32>
    %12 = tpu.matmul %11, %9, %cst_13 {dimension_numbers = #tpu.dot_dimension_numbers<[1], [0], [0], [1], [0, 0, 1, 1], [], []>} : vector<32x4xbf16>, vector<4x768xbf16>, vector<32x768xf32> -> vector<32x768xf32>
    %13 = arith.addf %8, %12 : vector<32x768xf32>
    %c0_14 = arith.constant 0 : index
    %c18 = arith.constant 18 : index
    %14 = vector.load %arg0[%c0_14, %c18] : memref<4x806xbf16, #tpu.memory_space<vmem>>, vector<4x768xbf16>
    %c3 = arith.constant 3 : index
    %c0_15 = arith.constant 0 : index
    %c0_16 = arith.constant 0 : index
    %15 = vector.load %arg1[%c3, %c0_15, %c0_16] : memref<9x32x4xbf16, #tpu.memory_space<vmem>>, vector<1x32x4xbf16>
    %16 = vector.shape_cast %15 : vector<1x32x4xbf16> to vector<32x4xbf16>
    %cst_17 = arith.constant dense<0.000000e+00> : vector<32x768xf32>
    %17 = tpu.matmul %16, %14, %cst_17 {dimension_numbers = #tpu.dot_dimension_numbers<[1], [0], [0], [1], [0, 0, 1, 1], [], []>} : vector<32x4xbf16>, vector<4x768xbf16>, vector<32x768xf32> -> vector<32x768xf32>
    %18 = arith.addf %13, %17 : vector<32x768xf32>
    %c0_18 = arith.constant 0 : index
    %c19 = arith.constant 19 : index
    %19 = vector.load %arg0[%c0_18, %c19] : memref<4x806xbf16, #tpu.memory_space<vmem>>, vector<4x768xbf16>
    %c4 = arith.constant 4 : index
    %c0_19 = arith.constant 0 : index
    %c0_20 = arith.constant 0 : index
    %20 = vector.load %arg1[%c4, %c0_19, %c0_20] : memref<9x32x4xbf16, #tpu.memory_space<vmem>>, vector<1x32x4xbf16>
    %21 = vector.shape_cast %20 : vector<1x32x4xbf16> to vector<32x4xbf16>
    %cst_21 = arith.constant dense<0.000000e+00> : vector<32x768xf32>
    %22 = tpu.matmul %21, %19, %cst_21 {dimension_numbers = #tpu.dot_dimension_numbers<[1], [0], [0], [1], [0, 0, 1, 1], [], []>} : vector<32x4xbf16>, vector<4x768xbf16>, vector<32x768xf32> -> vector<32x768xf32>
    %23 = arith.addf %18, %22 : vector<32x768xf32>
    %c0_22 = arith.constant 0 : index
    %c20 = arith.constant 20 : index
    %24 = vector.load %arg0[%c0_22, %c20] : memref<4x806xbf16, #tpu.memory_space<vmem>>, vector<4x768xbf16>
    %c5 = arith.constant 5 : index
    %c0_23 = arith.constant 0 : index
    %c0_24 = arith.constant 0 : index
    %25 = vector.load %arg1[%c5, %c0_23, %c0_24] : memref<9x32x4xbf16, #tpu.memory_space<vmem>>, vector<1x32x4xbf16>
    %26 = vector.shape_cast %25 : vector<1x32x4xbf16> to vector<32x4xbf16>
    %cst_25 = arith.constant dense<0.000000e+00> : vector<32x768xf32>
    %27 = tpu.matmul %26, %24, %cst_25 {dimension_numbers = #tpu.dot_dimension_numbers<[1], [0], [0], [1], [0, 0, 1, 1], [], []>} : vector<32x4xbf16>, vector<4x768xbf16>, vector<32x768xf32> -> vector<32x768xf32>
    %28 = arith.addf %23, %27 : vector<32x768xf32>
    %c0_26 = arith.constant 0 : index
    %c36 = arith.constant 36 : index
    %29 = vector.load %arg0[%c0_26, %c36] : memref<4x806xbf16, #tpu.memory_space<vmem>>, vector<4x768xbf16>
    %c6 = arith.constant 6 : index
    %c0_27 = arith.constant 0 : index
    %c0_28 = arith.constant 0 : index
    %30 = vector.load %arg1[%c6, %c0_27, %c0_28] : memref<9x32x4xbf16, #tpu.memory_space<vmem>>, vector<1x32x4xbf16>
    %31 = vector.shape_cast %30 : vector<1x32x4xbf16> to vector<32x4xbf16>
    %cst_29 = arith.constant dense<0.000000e+00> : vector<32x768xf32>
    %32 = tpu.matmul %31, %29, %cst_29 {dimension_numbers = #tpu.dot_dimension_numbers<[1], [0], [0], [1], [0, 0, 1, 1], [], []>} : vector<32x4xbf16>, vector<4x768xbf16>, vector<32x768xf32> -> vector<32x768xf32>
    %33 = arith.addf %28, %32 : vector<32x768xf32>
    %c0_30 = arith.constant 0 : index
    %c37 = arith.constant 37 : index
    %34 = vector.load %arg0[%c0_30, %c37] : memref<4x806xbf16, #tpu.memory_space<vmem>>, vector<4x768xbf16>
    %c7 = arith.constant 7 : index
    %c0_31 = arith.constant 0 : index
    %c0_32 = arith.constant 0 : index
    %35 = vector.load %arg1[%c7, %c0_31, %c0_32] : memref<9x32x4xbf16, #tpu.memory_space<vmem>>, vector<1x32x4xbf16>
    %36 = vector.shape_cast %35 : vector<1x32x4xbf16> to vector<32x4xbf16>
    %cst_33 = arith.constant dense<0.000000e+00> : vector<32x768xf32>
    %37 = tpu.matmul %36, %34, %cst_33 {dimension_numbers = #tpu.dot_dimension_numbers<[1], [0], [0], [1], [0, 0, 1, 1], [], []>} : vector<32x4xbf16>, vector<4x768xbf16>, vector<32x768xf32> -> vector<32x768xf32>
    %38 = arith.addf %33, %37 : vector<32x768xf32>
    %c0_34 = arith.constant 0 : index
    %c38 = arith.constant 38 : index
    %39 = vector.load %arg0[%c0_34, %c38] : memref<4x806xbf16, #tpu.memory_space<vmem>>, vector<4x768xbf16>
    %c8 = arith.constant 8 : index
    %c0_35 = arith.constant 0 : index
    %c0_36 = arith.constant 0 : index
    %40 = vector.load %arg1[%c8, %c0_35, %c0_36] : memref<9x32x4xbf16, #tpu.memory_space<vmem>>, vector<1x32x4xbf16>
    %41 = vector.shape_cast %40 : vector<1x32x4xbf16> to vector<32x4xbf16>
    %cst_37 = arith.constant dense<0.000000e+00> : vector<32x768xf32>
    %42 = tpu.matmul %41, %39, %cst_37 {dimension_numbers = #tpu.dot_dimension_numbers<[1], [0], [0], [1], [0, 0, 1, 1], [], []>} : vector<32x4xbf16>, vector<4x768xbf16>, vector<32x768xf32> -> vector<32x768xf32>
    %43 = arith.addf %38, %42 : vector<32x768xf32>
    %c0_38 = arith.constant 0 : index
    %c0_39 = arith.constant 0 : index
    %44 = vector.load %arg2[%c0_38, %c0_39] : memref<32x1xf32, #tpu.memory_space<vmem>>, vector<32x1xf32>
    %45 = vector.broadcast %44 : vector<32x1xf32> to vector<32x768xf32>
    %46 = arith.addf %43, %45 : vector<32x768xf32>
    %c0_40 = arith.constant 0 : index
    %c0_41 = arith.constant 0 : index
    %47 = vector.load %arg3[%c0_40, %c0_41] : memref<32x768xf32, #tpu.memory_space<vmem>>, vector<32x768xf32>
    tpu.vector_store %arg3[%c0_40, %c0_41], %46 {strides = array<i32>} : memref<32x768xf32, #tpu.memory_space<vmem>>, vector<32x768xf32>,
    return
  }
}

</mosaic_0001>

<llo_original>
// kernel: tile.8
$region0: #{tile.8}
  #allocation0 [shape = 's32[1]{0}', space=sflag, size = 0x4, scoped, tag = 'scoped memory for tile.8']
  %s0 = inlined_call_operand.vmem [shape: f32[8], index: 0, kind: input, shape index: {}]
  %s1 = inlined_call_operand.vmem [shape: f32[4,8], index: 1, kind: output, shape index: {}]
  // Predicated region
  $region2: #{tile.8} parent=0 // pred_check
    _
  $region3: #{tile.8} parent=0 // pred_check_branch
    %3 = sbr.rel (0) target = $region5
  $region4: #{tile.8} parent=0 // pred_region
    _
  $region5: #{tile.8} parent=0 // pred_fallthru
    _
  %v4 = vld [vmem:[%s0] ss:$0 sm:$0xff]
  %5 = vst [vmem:[%s1] sm:$0xf] %v4

// kernel: tile.0
$region0: #{tile.0}
  %s0 = inlined_call_operand.vmem [shape: f32[4,8], index: 0, kind: input, shape index: {}]
  %s1 = inlined_call_operand.vmem [shape: f32[32,1], index: 1, kind: output, shape index: {}]
  $region1: #{tile.0} parent=0
    #allocation0 [shape = 'u8[4096]{0}', space=vmem, size = 0x1000, scoped, tag = 'scoped mem for input reshape']
    %s3 = sshllo.u32 0, 4
    %v4 = vld [vmem:[%s0] sm:%s3]
    %5 = vst [vmem:[#allocation0] sm:%s3] %v4
    %v6 = vld [vmem:[#allocation0] sm:$0xf]
    %vm7 = vcmask 7168
    %8 = vst.msk [vmem:[%s1] ss:$8 sm:$0xf] %vm7, %v6
    %v9 = vld [vmem:[#allocation0] sm:$0xf]
    %10 = vrot.lane.b32.xlu0 %v9, 127
    %v11 = vpop.permute.xlu0 %10
    %vm12 = vcmask 7168
    %s13 = scalar_lea.vmem %s1, 1
    %14 = vst.msk [vmem:[%s13] ss:$8 sm:$0xf] %vm12, %v11
    %v15 = vld [vmem:[#allocation0] sm:$0xf]
    %16 = vrot.lane.b32.xlu0 %v15, 126
    %v17 = vpop.permute.xlu0 %16
    %vm18 = vcmask 7168
    %s19 = scalar_lea.vmem %s1, 2
    %20 = vst.msk [vmem:[%s19] ss:$8 sm:$0xf] %vm18, %v17
    %v21 = vld [vmem:[#allocation0] sm:$0xf]
    %22 = vrot.lane.b32.xlu0 %v21, 125
    %v23 = vpop.permute.xlu0 %22
    %vm24 = vcmask 7168
    %s25 = scalar_lea.vmem %s1, 3
    %26 = vst.msk [vmem:[%s25] ss:$8 sm:$0xf] %vm24, %v23
    %v27 = vld [vmem:[#allocation0] sm:$0xf]
    %28 = vrot.lane.b32.xlu0 %v27, 124
    %v29 = vpop.permute.xlu0 %28
    %vm30 = vcmask 7168
    %s31 = scalar_lea.vmem %s1, 4
    %32 = vst.msk [vmem:[%s31] ss:$8 sm:$0xf] %vm30, %v29
    %v33 = vld [vmem:[#allocation0] sm:$0xf]
    %34 = vrot.lane.b32.xlu0 %v33, 123
    %v35 = vpop.permute.xlu0 %34
    %vm36 = vcmask 7168
    %s37 = scalar_lea.vmem %s1, 5
    %38 = vst.msk [vmem:[%s37] ss:$8 sm:$0xf] %vm36, %v35
    %v39 = vld [vmem:[#allocation0] sm:$0xf]
    %40 = vrot.lane.b32.xlu0 %v39, 122
    %v41 = vpop.permute.xlu0 %40
    %vm42 = vcmask 7168
    %s43 = scalar_lea.vmem %s1, 6
    %44 = vst.msk [vmem:[%s43] ss:$8 sm:$0xf] %vm42, %v41
    %v45 = vld [vmem:[#allocation0] sm:$0xf]
    %46 = vrot.lane.b32.xlu0 %v45, 121
    %v47 = vpop.permute.xlu0 %46
    %vm48 = vcmask 7168
    %s49 = scalar_lea.vmem %s1, 7
    %50 = vst.msk [vmem:[%s49] ss:$8 sm:$0xf] %vm48, %v47

// kernel: decoder_forward.1
$region0: #{decoder_forward.1}
  #allocation0 [shape = 'u32[]', space=smem, size = 0x4, offset = 0x4, fixed_abs, tag = 'smem constant byte address 0x4 - core index']
  #allocation1 [shape = 'u32[144,128]{1,0:T(1,128)}', space=vmem, size = 0x12000, scoped, tag = 'internal scratch']
  %s0 = inlined_call_operand.vmem [shape: bf16[4,806], index: 0, kind: input, shape index: {}]
  %s1 = inlined_call_operand.vmem [shape: bf16[9,32,4], index: 1, kind: input, shape index: {}]
  %s2 = inlined_call_operand.vmem [shape: f32[32,1], index: 2, kind: input, shape index: {}]
  %s3 = inlined_call_operand.vmem [shape: f32[32,768], index: 3, kind: output, shape index: {}]
  %s4 = sld [smem:[#allocation0]]
  $region22: #{decoder_forward.1} parent=0
    _
  %s6 = ssub.s32 1, %s4
  %s7 = scalar_select 0, %s6, %s4
  // Predicated region
  $region2: #{decoder_forward.1} parent=0 // pred_check
    _
  $region3: #{decoder_forward.1} parent=0 // pred_check_branch
    %9 = sbr.rel (0) target = $region5
  $region4: #{decoder_forward.1} parent=0 // pred_region
    _
  $region5: #{decoder_forward.1} parent=0 // pred_fallthru
    _
  // Predicated region
  $region6: #{decoder_forward.1} parent=0 // pred_check
    _
  $region7: #{decoder_forward.1} parent=0 // pred_check_branch
    %11 = sbr.rel (0) target = $region9
  $region8: #{decoder_forward.1} parent=0 // pred_region
    _
  $region9: #{decoder_forward.1} parent=0 // pred_fallthru
    _
  // Predicated region
  $region10: #{decoder_forward.1} parent=0 // pred_check
    _
  $region11: #{decoder_forward.1} parent=0 // pred_check_branch
    %13 = sbr.rel (0) target = $region13
  $region12: #{decoder_forward.1} parent=0 // pred_region
    _
  $region13: #{decoder_forward.1} parent=0 // pred_fallthru
    _
  %v15 = vld [vmem:[%s0] sm:$0xff]
  %v16 = vld [vmem:[%s0 + $0x8] sm:$0xf]
  %v17 = vld [vmem:[%s1] sm:$0xf]
  %v18 = vld [vmem:[%s1 + $0x4] sm:$0xf]
  %v19 = vld [vmem:[%s1 + $0x8] sm:$0xf]
  %v20 = vld [vmem:[%s1 + $0xc] sm:$0xf]
  %v21 = vld [vmem:[%s0 + $0x8] sm:$0x3f]
  %s22 = scalar_lea.vmem %s1, 16
  %v23 = vld [vmem:[%s22] sm:$0xf]
  %v24 = vld [vmem:[%s22 + $0x4] sm:$0xf]
  %v25 = vld [vmem:[%s22 + $0x8] sm:$0xf]
  %v26 = vld [vmem:[%s22 + $0xc] sm:$0xf]
  %v31 = vunpack.c.l.b16 %v23
  %v32 = vunpack.c.l.b16 %v24
  %v33 = vunpack.c.l.b16 %v25
  %v34 = vunpack.c.l.b16 %v26
  %v35 = vpack.c.b16 %v32, %v31
  %v36 = vpack.c.b16 %v34, %v33
  %v39 = vcombine.high %v15, %v15
  %v41 = vunpack.c.l.s4 1983009808
  %v42 = vunpack.c.0.s8 %v41
  %v43 = vlaneseq
  %v44 = vshrl.u32 %v43, 7
  %v45 = vsub.s32 %v42, %v44
  %v46 = vrot.slane %v15, %v45
  %v48 = vunpack.c.l.s4 1983009808
  %v49 = vunpack.c.0.s8 %v48
  %v50 = vlaneseq
  %v51 = vshrl.u32 %v50, 7
  %v52 = vsub.s32 %v49, %v51
  %v53 = vrot.slane %v39, %v52
  %v54 = vcombine.high %v46, %v46
  %v55 = vcombine.high %v53, %v53
  %v56 = vcombine.high %v21, %v21
  %v58 = vunpack.c.l.s4 1983009808
  %v59 = vunpack.c.0.s8 %v58
  %v60 = vlaneseq
  %v61 = vshrl.u32 %v60, 7
  %v62 = vsub.s32 %v59, %v61
  %v63 = vrot.slane %v21, %v62
  %v65 = vunpack.c.l.s4 1983009808
  %v66 = vunpack.c.0.s8 %v65
  %v67 = vlaneseq
  %v68 = vshrl.u32 %v67, 7
  %v69 = vsub.s32 %v66, %v68
  %v70 = vrot.slane %v56, %v69
  %v71 = vcombine.high %v63, %v63
  %72 = vrot.lane.b32.xlu0 %v46, 127
  %v73 = vpop.permute.xlu0 %72
  %74 = vrot.lane.b32.xlu0 %v54, 127
  %v75 = vpop.permute.xlu0 %74
  %76 = vrot.lane.b32.xlu0 %v53, 127
  %v77 = vpop.permute.xlu0 %76
  %78 = vrot.lane.b32.xlu0 %v55, 127
  %v79 = vpop.permute.xlu0 %78
  %80 = vrot.lane.b32.xlu0 %v63, 127
  %v81 = vpop.permute.xlu0 %80
  %82 = vrot.lane.b32.xlu0 %v71, 127
  %v83 = vpop.permute.xlu0 %82
  %84 = vrot.lane.b32.xlu0 %v70, 127
  %v85 = vpop.permute.xlu0 %84
  %vm86 = vcmask 1039360
  %v87 = vsel %vm86, %v73, %v75
  %v88 = vsel %vm86, %v75, %v77
  %v89 = vsel %vm86, %v77, %v79
  %v90 = vsel %vm86, %v79, %v81
  %v91 = vsel %vm86, %v81, %v83
  %v92 = vsel %vm86, %v83, %v85
  %vm93 = vcmask 31744
  %v95 = vsel %vm93, %v35, 0
  %v98 = vsel %vm93, %v36, 0
  %vm100 = vcmask 1041408
  %v102 = vsel %vm100, %v87, 0
  %v105 = vsel %vm100, %v88, 0
  %v108 = vsel %vm100, %v89, 0
  %v111 = vsel %vm100, %v90, 0
  %v114 = vsel %vm100, %v91, 0
  %v117 = vsel %vm100, %v92, 0
  %119 = vmatprep.subr.bf16.mxu0 %v105
  %120 = vmatpush1.bf16.msra.mxu0 %v102
  %121 = vmatprep.subr.bf16.mxu0 0
  %122 = vmatpush1.bf16.msra.mxu0 0
  %123 = vmatprep.subr.bf16.mxu0 0
  %124 = vmatpush1.bf16.msra.mxu0 0
  %125 = vmatprep.subr.bf16.mxu0 0
  %126 = vmatpush1.bf16.msra.mxu0 0
  %127 = vmatprep.subr.bf16.mxu0 0
  %128 = vmatpush1.bf16.msra.mxu0 0
  %129 = vmatprep.subr.bf16.mxu0 0
  %130 = vmatpush1.bf16.msra.mxu0 0
  %131 = vmatprep.subr.bf16.mxu0 0
  %132 = vmatpush1.bf16.msra.mxu0 0
  %133 = vmatprep.subr.bf16.mxu0 0
  %134 = vmatpush1.bf16.msra.mxu0 0
  %135 = vmatprep.subr.bf16.mxu0 0
  %136 = vmatpush1.bf16.msra.mxu0 0
  %137 = vmatprep.subr.bf16.mxu0 0
  %138 = vmatpush1.bf16.msra.mxu0 0
  %139 = vmatprep.subr.bf16.mxu0 0
  %140 = vmatpush1.bf16.msra.mxu0 0
  %141 = vmatprep.subr.bf16.mxu0 0
  %142 = vmatpush1.bf16.msra.mxu0 0
  %143 = vmatprep.subr.bf16.mxu0 0
  %144 = vmatpush1.bf16.msra.mxu0 0
  %145 = vmatprep.subr.bf16.mxu0 0
  %146 = vmatpush1.bf16.msra.mxu0 0
  %147 = vmatprep.subr.bf16.mxu0 0
  %148 = vmatpush1.bf16.msra.mxu0 0
  %149 = vmatprep.subr.bf16.mxu0 0
  %150 = vmatpush1.bf16.msra.mxu0 0
  %151 = vmatprep.mubr.bf16.mxu0 0
  %152 = vmatmul.mubr.bf16.gmra.mrb[0].mxu0 %v95
  %v153 = vpop.f32.mrb[0].mxu0
  %v154 = vadd.f32 0.0, %v153
  %v155 = vpop.f32.mrb[0].mxu0
  %v156 = vadd.f32 0.0, %v155
  %v157 = vpop.f32.mrb[0].mxu0
  %v158 = vadd.f32 0.0, %v157
  %v159 = vpop.f32.mrb[0].mxu0
  %v160 = vadd.f32 0.0, %v159
  %161 = vmatprep.mubr.bf16.mxu0 0
  %162 = vmatmul.mubr.bf16.gmra.mrb[0].mxu0 %v98
  %v163 = vpop.f32.mrb[0].mxu0
  %v164 = vadd.f32 0.0, %v163
  %v165 = vpop.f32.mrb[0].mxu0
  %v166 = vadd.f32 0.0, %v165
  %v167 = vpop.f32.mrb[0].mxu0
  %v168 = vadd.f32 0.0, %v167
  %v169 = vpop.f32.mrb[0].mxu0
  %v170 = vadd.f32 0.0, %v169
  %171 = vdwg.mxu0
  %172 = vmatprep.subr.bf16.mxu0 %v111
  %173 = vmatpush1.bf16.msra.mxu0 %v108
  %174 = vmatprep.subr.bf16.mxu0 0
  %175 = vmatpush1.bf16.msra.mxu0 0
  %176 = vmatprep.subr.bf16.mxu0 0
  %177 = vmatpush1.bf16.msra.mxu0 0
  %178 = vmatprep.subr.bf16.mxu0 0
  %179 = vmatpush1.bf16.msra.mxu0 0
  %180 = vmatprep.subr.bf16.mxu0 0
  %181 = vmatpush1.bf16.msra.mxu0 0
  %182 = vmatprep.subr.bf16.mxu0 0
  %183 = vmatpush1.bf16.msra.mxu0 0
  %184 = vmatprep.subr.bf16.mxu0 0
  %185 = vmatpush1.bf16.msra.mxu0 0
  %186 = vmatprep.subr.bf16.mxu0 0
  %187 = vmatpush1.bf16.msra.mxu0 0
  %188 = vmatprep.subr.bf16.mxu0 0
  %189 = vmatpush1.bf16.msra.mxu0 0
  %190 = vmatprep.subr.bf16.mxu0 0
  %191 = vmatpush1.bf16.msra.mxu0 0
  %192 = vmatprep.subr.bf16.mxu0 0
  %193 = vmatpush1.bf16.msra.mxu0 0
  %194 = vmatprep.subr.bf16.mxu0 0
  %195 = vmatpush1.bf16.msra.mxu0 0
  %196 = vmatprep.subr.bf16.mxu0 0
  %197 = vmatpush1.bf16.msra.mxu0 0
  %198 = vmatprep.subr.bf16.mxu0 0
  %199 = vmatpush1.bf16.msra.mxu0 0
  %200 = vmatprep.subr.bf16.mxu0 0
  %201 = vmatpush1.bf16.msra.mxu0 0
  %202 = vmatprep.subr.bf16.mxu0 0
  %203 = vmatpush1.bf16.msra.mxu0 0
  %204 = vmatprep.mubr.bf16.mxu0 0
  %205 = vmatmul.mubr.bf16.gmra.mrb[0].mxu0 %v95
  %v206 = vpop.f32.mrb[0].mxu0
  %v207 = vadd.f32 0.0, %v206
  %v208 = vpop.f32.mrb[0].mxu0
  %v209 = vadd.f32 0.0, %v208
  %v210 = vpop.f32.mrb[0].mxu0
  %v211 = vadd.f32 0.0, %v210
  %v212 = vpop.f32.mrb[0].mxu0
  %v213 = vadd.f32 0.0, %v212
  %214 = vmatprep.mubr.bf16.mxu0 0
  %215 = vmatmul.mubr.bf16.gmra.mrb[0].mxu0 %v98
  %v216 = vpop.f32.mrb[0].mxu0
  %v217 = vadd.f32 0.0, %v216
  %v218 = vpop.f32.mrb[0].mxu0
  %v219 = vadd.f32 0.0, %v218
  %v220 = vpop.f32.mrb[0].mxu0
  %v221 = vadd.f32 0.0, %v220
  %v222 = vpop.f32.mrb[0].mxu0
  %v223 = vadd.f32 0.0, %v222
  %224 = vdwg.mxu0
  %225 = vmatprep.subr.bf16.mxu0 %v117
  %226 = vmatpush1.bf16.msra.mxu0 %v114
  %227 = vmatprep.subr.bf16.mxu0 0
  %228 = vmatpush1.bf16.msra.mxu0 0
  %229 = vmatprep.subr.bf16.mxu0 0
  %230 = vmatpush1.bf16.msra.mxu0 0
  %231 = vmatprep.subr.bf16.mxu0 0
  %232 = vmatpush1.bf16.msra.mxu0 0
  %233 = vmatprep.subr.bf16.mxu0 0
  %234 = vmatpush1.bf16.msra.mxu0 0
  %235 = vmatprep.subr.bf16.mxu0 0
  %236 = vmatpush1.bf16.msra.mxu0 0
  %237 = vmatprep.subr.bf16.mxu0 0
  %238 = vmatpush1.bf16.msra.mxu0 0
  %239 = vmatprep.subr.bf16.mxu0 0
  %240 = vmatpush1.bf16.msra.mxu0 0
  %241 = vmatprep.subr.bf16.mxu0 0
  %242 = vmatpush1.bf16.msra.mxu0 0
  %243 = vmatprep.subr.bf16.mxu0 0
  %244 = vmatpush1.bf16.msra.mxu0 0
  %245 = vmatprep.subr.bf16.mxu0 0
  %246 = vmatpush1.bf16.msra.mxu0 0
  %247 = vmatprep.subr.bf16.mxu0 0
  %248 = vmatpush1.bf16.msra.mxu0 0
  %249 = vmatprep.subr.bf16.mxu0 0
  %250 = vmatpush1.bf16.msra.mxu0 0
  %251 = vmatprep.subr.bf16.mxu0 0
  %252 = vmatpush1.bf16.msra.mxu0 0
  %253 = vmatprep.subr.bf16.mxu0 0
  %254 = vmatpush1.bf16.msra.mxu0 0
  %255 = vmatprep.subr.bf16.mxu0 0
  %256 = vmatpush1.bf16.msra.mxu0 0
  %257 = vmatprep.mubr.bf16.mxu0 0
  %258 = vmatmul.mubr.bf16.gmra.mrb[0].mxu0 %v95
  %v259 = vpop.f32.mrb[0].mxu0
  %v260 = vadd.f32 0.0, %v259
  %v261 = vpop.f32.mrb[0].mxu0
  %v262 = vadd.f32 0.0, %v261
  %v263 = vpop.f32.mrb[0].mxu0
  %v264 = vadd.f32 0.0, %v263
  %v265 = vpop.f32.mrb[0].mxu0
  %v266 = vadd.f32 0.0, %v265
  %267 = vmatprep.mubr.bf16.mxu0 0
  %268 = vmatmul.mubr.bf16.gmra.mrb[0].mxu0 %v98
  %v269 = vpop.f32.mrb[0].mxu0
  %v270 = vadd.f32 0.0, %v269
  %v271 = vpop.f32.mrb[0].mxu0
  %v272 = vadd.f32 0.0, %v271
  %v273 = vpop.f32.mrb[0].mxu0
  %v274 = vadd.f32 0.0, %v273
  %v275 = vpop.f32.mrb[0].mxu0
  %v276 = vadd.f32 0.0, %v275
  %277 = vdwg.mxu0
  %v282 = vunpack.c.l.b16 %v17
  %v283 = vunpack.c.l.b16 %v18
  %v284 = vunpack.c.l.b16 %v19
  %v285 = vunpack.c.l.b16 %v20
  %v286 = vpack.c.b16 %v283, %v282
  %v287 = vpack.c.b16 %v285, %v284
  %v290 = vunpack.c.l.s4 1983009808
  %v291 = vunpack.c.0.s8 %v290
  %v292 = vlaneseq
  %v293 = vshrl.u32 %v292, 7
  %v294 = vsub.s32 %v291, %v293
  %v295 = vrot.slane %v16, %v294
  %v296 = vcombine.high %v295, %v295
  %v298 = vsel %vm93, %v286, 0
  %v301 = vsel %vm93, %v287, 0
  %v304 = vsel %vm100, %v46, 0
  %v307 = vsel %vm100, %v54, 0
  %v310 = vsel %vm100, %v53, 0
  %v313 = vsel %vm100, %v55, 0
  %v316 = vsel %vm100, %v295, 0
  %v319 = vsel %vm100, %v296, 0
  %321 = vmatprep.subr.bf16.mxu0 %v307
  %322 = vmatpush1.bf16.msra.mxu0 %v304
  %323 = vmatprep.subr.bf16.mxu0 0
  %324 = vmatpush1.bf16.msra.mxu0 0
  %325 = vmatprep.subr.bf16.mxu0 0
  %326 = vmatpush1.bf16.msra.mxu0 0
  %327 = vmatprep.subr.bf16.mxu0 0
  %328 = vmatpush1.bf16.msra.mxu0 0
  %329 = vmatprep.subr.bf16.mxu0 0
  %330 = vmatpush1.bf16.msra.mxu0 0
  %331 = vmatprep.subr.bf16.mxu0 0
  %332 = vmatpush1.bf16.msra.mxu0 0
  %333 = vmatprep.subr.bf16.mxu0 0
  %334 = vmatpush1.bf16.msra.mxu0 0
  %335 = vmatprep.subr.bf16.mxu0 0
  %336 = vmatpush1.bf16.msra.mxu0 0
  %337 = vmatprep.subr.bf16.mxu0 0
  %338 = vmatpush1.bf16.msra.mxu0 0
  %339 = vmatprep.subr.bf16.mxu0 0
  %340 = vmatpush1.bf16.msra.mxu0 0
  %341 = vmatprep.subr.bf16.mxu0 0
  %342 = vmatpush1.bf16.msra.mxu0 0
  %343 = vmatprep.subr.bf16.mxu0 0
  %344 = vmatpush1.bf16.msra.mxu0 0
  %345 = vmatprep.subr.bf16.mxu0 0
  %346 = vmatpush1.bf16.msra.mxu0 0
  %347 = vmatprep.subr.bf16.mxu0 0
  %348 = vmatpush1.bf16.msra.mxu0 0
  %349 = vmatprep.subr.bf16.mxu0 0
  %350 = vmatpush1.bf16.msra.mxu0 0
  %351 = vmatprep.subr.bf16.mxu0 0
  %352 = vmatpush1.bf16.msra.mxu0 0
  %353 = vmatprep.mubr.bf16.mxu0 0
  %354 = vmatmul.mubr.bf16.gmra.mrb[0].mxu0 %v298
  %v355 = vpop.f32.mrb[0].mxu0
  %v356 = vadd.f32 %v154, %v355
  %v357 = vpop.f32.mrb[0].mxu0
  %v358 = vadd.f32 %v156, %v357
  %v359 = vpop.f32.mrb[0].mxu0
  %v360 = vadd.f32 %v158, %v359
  %v361 = vpop.f32.mrb[0].mxu0
  %v362 = vadd.f32 %v160, %v361
  %363 = vmatprep.mubr.bf16.mxu0 0
  %364 = vmatmul.mubr.bf16.gmra.mrb[0].mxu0 %v301
  %v365 = vpop.f32.mrb[0].mxu0
  %v366 = vadd.f32 %v164, %v365
  %v367 = vpop.f32.mrb[0].mxu0
  %v368 = vadd.f32 %v166, %v367
  %v369 = vpop.f32.mrb[0].mxu0
  %v370 = vadd.f32 %v168, %v369
  %v371 = vpop.f32.mrb[0].mxu0
  %v372 = vadd.f32 %v170, %v371
  %373 = vdwg.mxu0
  %374 = vmatprep.subr.bf16.mxu0 %v313
  %375 = vmatpush1.bf16.msra.mxu0 %v310
  %376 = vmatprep.subr.bf16.mxu0 0
  %377 = vmatpush1.bf16.msra.mxu0 0
  %378 = vmatprep.subr.bf16.mxu0 0
  %379 = vmatpush1.bf16.msra.mxu0 0
  %380 = vmatprep.subr.bf16.mxu0 0
  %381 = vmatpush1.bf16.msra.mxu0 0
  %382 = vmatprep.subr.bf16.mxu0 0
  %383 = vmatpush1.bf16.msra.mxu0 0
  %384 = vmatprep.subr.bf16.mxu0 0
  %385 = vmatpush1.bf16.msra.mxu0 0
  %386 = vmatprep.subr.bf16.mxu0 0
  %387 = vmatpush1.bf16.msra.mxu0 0
  %388 = vmatprep.subr.bf16.mxu0 0
  %389 = vmatpush1.bf16.msra.mxu0 0
  %390 = vmatprep.subr.bf16.mxu0 0
  %391 = vmatpush1.bf16.msra.mxu0 0
  %392 = vmatprep.subr.bf16.mxu0 0
  %393 = vmatpush1.bf16.msra.mxu0 0
  %394 = vmatprep.subr.bf16.mxu0 0
  %395 = vmatpush1.bf16.msra.mxu0 0
  %396 = vmatprep.subr.bf16.mxu0 0
  %397 = vmatpush1.bf16.msra.mxu0 0
  %398 = vmatprep.subr.bf16.mxu0 0
  %399 = vmatpush1.bf16.msra.mxu0 0
  %400 = vmatprep.subr.bf16.mxu0 0
  %401 = vmatpush1.bf16.msra.mxu0 0
  %402 = vmatprep.subr.bf16.mxu0 0
  %403 = vmatpush1.bf16.msra.mxu0 0
  %404 = vmatprep.subr.bf16.mxu0 0
  %405 = vmatpush1.bf16.msra.mxu0 0
  %406 = vmatprep.mubr.bf16.mxu0 0
  %407 = vmatmul.mubr.bf16.gmra.mrb[0].mxu0 %v298
  %v408 = vpop.f32.mrb[0].mxu0
  %v409 = vadd.f32 %v207, %v408
  %v410 = vpop.f32.mrb[0].mxu0
  %v411 = vadd.f32 %v209, %v410
  %v412 = vpop.f32.mrb[0].mxu0
  %v413 = vadd.f32 %v211, %v412
  %v414 = vpop.f32.mrb[0].mxu0
  %v415 = vadd.f32 %v213, %v414
  %416 = vmatprep.mubr.bf16.mxu0 0
  %417 = vmatmul.mubr.bf16.gmra.mrb[0].mxu0 %v301
  %v418 = vpop.f32.mrb[0].mxu0
  %v419 = vadd.f32 %v217, %v418
  %v420 = vpop.f32.mrb[0].mxu0
  %v421 = vadd.f32 %v219, %v420
  %v422 = vpop.f32.mrb[0].mxu0
  %v423 = vadd.f32 %v221, %v422
  %v424 = vpop.f32.mrb[0].mxu0
  %v425 = vadd.f32 %v223, %v424
  %426 = vdwg.mxu0
  %427 = vmatprep.subr.bf16.mxu0 %v319
  %428 = vmatpush1.bf16.msra.mxu0 %v316
  %429 = vmatprep.subr.bf16.mxu0 0
  %430 = vmatpush1.bf16.msra.mxu0 0
  %431 = vmatprep.subr.bf16.mxu0 0
  %432 = vmatpush1.bf16.msra.mxu0 0
  %433 = vmatprep.subr.bf16.mxu0 0
  %434 = vmatpush1.bf16.msra.mxu0 0
  %435 = vmatprep.subr.bf16.mxu0 0
  %436 = vmatpush1.bf16.msra.mxu0 0
  %437 = vmatprep.subr.bf16.mxu0 0
  %438 = vmatpush1.bf16.msra.mxu0 0
  %439 = vmatprep.subr.bf16.mxu0 0
  %440 = vmatpush1.bf16.msra.mxu0 0
  %441 = vmatprep.subr.bf16.mxu0 0
  %442 = vmatpush1.bf16.msra.mxu0 0
  %443 = vmatprep.subr.bf16.mxu0 0
  %444 = vmatpush1.bf16.msra.mxu0 0
  %445 = vmatprep.subr.bf16.mxu0 0
  %446 = vmatpush1.bf16.msra.mxu0 0
  %447 = vmatprep.subr.bf16.mxu0 0
  %448 = vmatpush1.bf16.msra.mxu0 0
  %449 = vmatprep.subr.bf16.mxu0 0
  %450 = vmatpush1.bf16.msra.mxu0 0
  %451 = vmatprep.subr.bf16.mxu0 0
  %452 = vmatpush1.bf16.msra.mxu0 0
  %453 = vmatprep.subr.bf16.mxu0 0
  %454 = vmatpush1.bf16.msra.mxu0 0
  %455 = vmatprep.subr.bf16.mxu0 0
  %456 = vmatpush1.bf16.msra.mxu0 0
  %457 = vmatprep.subr.bf16.mxu0 0
  %458 = vmatpush1.bf16.msra.mxu0 0
  %459 = vmatprep.mubr.bf16.mxu0 0
  %460 = vmatmul.mubr.bf16.gmra.mrb[0].mxu0 %v298
  %v461 = vpop.f32.mrb[0].mxu0
  %v462 = vadd.f32 %v260, %v461
  %v463 = vpop.f32.mrb[0].mxu0
  %v464 = vadd.f32 %v262, %v463
  %v465 = vpop.f32.mrb[0].mxu0
  %v466 = vadd.f32 %v264, %v465
  %v467 = vpop.f32.mrb[0].mxu0
  %v468 = vadd.f32 %v266, %v467
  %469 = vmatprep.mubr.bf16.mxu0 0
  %470 = vmatmul.mubr.bf16.gmra.mrb[0].mxu0 %v301
  %v471 = vpop.f32.mrb[0].mxu0
  %v472 = vadd.f32 %v270, %v471
  %v473 = vpop.f32.mrb[0].mxu0
  %v474 = vadd.f32 %v272, %v473
  %v475 = vpop.f32.mrb[0].mxu0
  %v476 = vadd.f32 %v274, %v475
  %v477 = vpop.f32.mrb[0].mxu0
  %v478 = vadd.f32 %v276, %v477
  %479 = vdwg.mxu0
  %v480 = vld [vmem:[%s0] sm:$0xff]
  %v481 = vld [vmem:[%s0 + $0x8] sm:$0x3f]
  %s482 = scalar_lea.vmem %s1, 32
  %v483 = vld [vmem:[%s482] sm:$0xf]
  %v484 = vld [vmem:[%s482 + $0x4] sm:$0xf]
  %v485 = vld [vmem:[%s482 + $0x8] sm:$0xf]
  %v486 = vld [vmem:[%s482 + $0xc] sm:$0xf]
  %v491 = vunpack.c.l.b16 %v483
  %v492 = vunpack.c.l.b16 %v484
  %v493 = vunpack.c.l.b16 %v485
  %v494 = vunpack.c.l.b16 %v486
  %v495 = vpack.c.b16 %v492, %v491
  %v496 = vpack.c.b16 %v494, %v493
  %v499 = vcombine.high %v480, %v480
  %v501 = vunpack.c.l.s4 1983009808
  %v502 = vunpack.c.0.s8 %v501
  %v503 = vlaneseq
  %v504 = vshrl.u32 %v503, 7
  %v505 = vsub.s32 %v502, %v504
  %v506 = vrot.slane %v480, %v505
  %v508 = vunpack.c.l.s4 1983009808
  %v509 = vunpack.c.0.s8 %v508
  %v510 = vlaneseq
  %v511 = vshrl.u32 %v510, 7
  %v512 = vsub.s32 %v509, %v511
  %v513 = vrot.slane %v499, %v512
  %v514 = vcombine.high %v506, %v506
  %v515 = vcombine.high %v513, %v513
  %v516 = vcombine.high %v481, %v481
  %v518 = vunpack.c.l.s4 1983009808
  %v519 = vunpack.c.0.s8 %v518
  %v520 = vlaneseq
  %v521 = vshrl.u32 %v520, 7
  %v522 = vsub.s32 %v519, %v521
  %v523 = vrot.slane %v481, %v522
  %v525 = vunpack.c.l.s4 1983009808
  %v526 = vunpack.c.0.s8 %v525
  %v527 = vlaneseq
  %v528 = vshrl.u32 %v527, 7
  %v529 = vsub.s32 %v526, %v528
  %v530 = vrot.slane %v516, %v529
  %v531 = vcombine.high %v523, %v523
  %532 = vrot.lane.b32.xlu0 %v506, 126
  %v533 = vpop.permute.xlu0 %532
  %534 = vrot.lane.b32.xlu0 %v514, 126
  %v535 = vpop.permute.xlu0 %534
  %536 = vrot.lane.b32.xlu0 %v513, 126
  %v537 = vpop.permute.xlu0 %536
  %538 = vrot.lane.b32.xlu0 %v515, 126
  %v539 = vpop.permute.xlu0 %538
  %540 = vrot.lane.b32.xlu0 %v523, 126
  %v541 = vpop.permute.xlu0 %540
  %542 = vrot.lane.b32.xlu0 %v531, 126
  %v543 = vpop.permute.xlu0 %542
  %544 = vrot.lane.b32.xlu0 %v530, 126
  %v545 = vpop.permute.xlu0 %544
  %vm546 = vcmask 1031168
  %v547 = vsel %vm546, %v533, %v535
  %v548 = vsel %vm546, %v535, %v537
  %v549 = vsel %vm546, %v537, %v539
  %v550 = vsel %vm546, %v539, %v541
  %v551 = vsel %vm546, %v541, %v543
  %v552 = vsel %vm546, %v543, %v545
  %v554 = vsel %vm93, %v495, 0
  %v557 = vsel %vm93, %v496, 0
  %v560 = vsel %vm100, %v547, 0
  %v563 = vsel %vm100, %v548, 0
  %v566 = vsel %vm100, %v549, 0
  %v569 = vsel %vm100, %v550, 0
  %v572 = vsel %vm100, %v551, 0
  %v575 = vsel %vm100, %v552, 0
  %577 = vmatprep.subr.bf16.mxu0 %v563
  %578 = vmatpush1.bf16.msra.mxu0 %v560
  %579 = vmatprep.subr.bf16.mxu0 0
  %580 = vmatpush1.bf16.msra.mxu0 0
  %581 = vmatprep.subr.bf16.mxu0 0
  %582 = vmatpush1.bf16.msra.mxu0 0
  %583 = vmatprep.subr.bf16.mxu0 0
  %584 = vmatpush1.bf16.msra.mxu0 0
  %585 = vmatprep.subr.bf16.mxu0 0
  %586 = vmatpush1.bf16.msra.mxu0 0
  %587 = vmatprep.subr.bf16.mxu0 0
  %588 = vmatpush1.bf16.msra.mxu0 0
  %589 = vmatprep.subr.bf16.mxu0 0
  %590 = vmatpush1.bf16.msra.mxu0 0
  %591 = vmatprep.subr.bf16.mxu0 0
  %592 = vmatpush1.bf16.msra.mxu0 0
  %593 = vmatprep.subr.bf16.mxu0 0
  %594 = vmatpush1.bf16.msra.mxu0 0
  %595 = vmatprep.subr.bf16.mxu0 0
  %596 = vmatpush1.bf16.msra.mxu0 0
  %597 = vmatprep.subr.bf16.mxu0 0
  %598 = vmatpush1.bf16.msra.mxu0 0
  %599 = vmatprep.subr.bf16.mxu0 0
  %600 = vmatpush1.bf16.msra.mxu0 0
  %601 = vmatprep.subr.bf16.mxu0 0
  %602 = vmatpush1.bf16.msra.mxu0 0
  %603 = vmatprep.subr.bf16.mxu0 0
  %604 = vmatpush1.bf16.msra.mxu0 0
  %605 = vmatprep.subr.bf16.mxu0 0
  %606 = vmatpush1.bf16.msra.mxu0 0
  %607 = vmatprep.subr.bf16.mxu0 0
  %608 = vmatpush1.bf16.msra.mxu0 0
  %609 = vmatprep.mubr.bf16.mxu0 0
  %610 = vmatmul.mubr.bf16.gmra.mrb[0].mxu0 %v554
  %v611 = vpop.f32.mrb[0].mxu0
  %v612 = vadd.f32 0.0, %v611
  %v613 = vpop.f32.mrb[0].mxu0
  %v614 = vadd.f32 0.0, %v613
  %v615 = vpop.f32.mrb[0].mxu0
  %v616 = vadd.f32 0.0, %v615
  %v617 = vpop.f32.mrb[0].mxu0
  %v618 = vadd.f32 0.0, %v617
  %619 = vmatprep.mubr.bf16.mxu0 0
  %620 = vmatmul.mubr.bf16.gmra.mrb[0].mxu0 %v557
  %v621 = vpop.f32.mrb[0].mxu0
  %v622 = vadd.f32 0.0, %v621
  %v623 = vpop.f32.mrb[0].mxu0
  %v624 = vadd.f32 0.0, %v623
  %v625 = vpop.f32.mrb[0].mxu0
  %v626 = vadd.f32 0.0, %v625
  %v627 = vpop.f32.mrb[0].mxu0
  %v628 = vadd.f32 0.0, %v627
  %629 = vdwg.mxu0
  %630 = vmatprep.subr.bf16.mxu0 %v569
  %631 = vmatpush1.bf16.msra.mxu0 %v566
  %632 = vmatprep.subr.bf16.mxu0 0
  %633 = vmatpush1.bf16.msra.mxu0 0
  %634 = vmatprep.subr.bf16.mxu0 0
  %635 = vmatpush1.bf16.msra.mxu0 0
  %636 = vmatprep.subr.bf16.mxu0 0
  %637 = vmatpush1.bf16.msra.mxu0 0
  %638 = vmatprep.subr.bf16.mxu0 0
  %639 = vmatpush1.bf16.msra.mxu0 0
  %640 = vmatprep.subr.bf16.mxu0 0
  %641 = vmatpush1.bf16.msra.mxu0 0
  %642 = vmatprep.subr.bf16.mxu0 0
  %643 = vmatpush1.bf16.msra.mxu0 0
  %644 = vmatprep.subr.bf16.mxu0 0
  %645 = vmatpush1.bf16.msra.mxu0 0
  %646 = vmatprep.subr.bf16.mxu0 0
  %647 = vmatpush1.bf16.msra.mxu0 0
  %648 = vmatprep.subr.bf16.mxu0 0
  %649 = vmatpush1.bf16.msra.mxu0 0
  %650 = vmatprep.subr.bf16.mxu0 0
  %651 = vmatpush1.bf16.msra.mxu0 0
  %652 = vmatprep.subr.bf16.mxu0 0
  %653 = vmatpush1.bf16.msra.mxu0 0
  %654 = vmatprep.subr.bf16.mxu0 0
  %655 = vmatpush1.bf16.msra.mxu0 0
  %656 = vmatprep.subr.bf16.mxu0 0
  %657 = vmatpush1.bf16.msra.mxu0 0
  %658 = vmatprep.subr.bf16.mxu0 0
  %659 = vmatpush1.bf16.msra.mxu0 0
  %660 = vmatprep.subr.bf16.mxu0 0
  %661 = vmatpush1.bf16.msra.mxu0 0
  %662 = vmatprep.mubr.bf16.mxu0 0
  %663 = vmatmul.mubr.bf16.gmra.mrb[0].mxu0 %v554
  %v664 = vpop.f32.mrb[0].mxu0
  %v665 = vadd.f32 0.0, %v664
  %v666 = vpop.f32.mrb[0].mxu0
  %v667 = vadd.f32 0.0, %v666
  %v668 = vpop.f32.mrb[0].mxu0
  %v669 = vadd.f32 0.0, %v668
  %v670 = vpop.f32.mrb[0].mxu0
  %v671 = vadd.f32 0.0, %v670
  %672 = vmatprep.mubr.bf16.mxu0 0
  %673 = vmatmul.mubr.bf16.gmra.mrb[0].mxu0 %v557
  %v674 = vpop.f32.mrb[0].mxu0
  %v675 = vadd.f32 0.0, %v674
  %v676 = vpop.f32.mrb[0].mxu0
  %v677 = vadd.f32 0.0, %v676
  %v678 = vpop.f32.mrb[0].mxu0
  %v679 = vadd.f32 0.0, %v678
  %v680 = vpop.f32.mrb[0].mxu0
  %v681 = vadd.f32 0.0, %v680
  %682 = vdwg.mxu0
  %683 = vmatprep.subr.bf16.mxu0 %v575
  %684 = vmatpush1.bf16.msra.mxu0 %v572
  %685 = vmatprep.subr.bf16.mxu0 0
  %686 = vmatpush1.bf16.msra.mxu0 0
  %687 = vmatprep.subr.bf16.mxu0 0
  %688 = vmatpush1.bf16.msra.mxu0 0
  %689 = vmatprep.subr.bf16.mxu0 0
  %690 = vmatpush1.bf16.msra.mxu0 0
  %691 = vmatprep.subr.bf16.mxu0 0
  %692 = vmatpush1.bf16.msra.mxu0 0
  %693 = vmatprep.subr.bf16.mxu0 0
  %694 = vmatpush1.bf16.msra.mxu0 0
  %695 = vmatprep.subr.bf16.mxu0 0
  %696 = vmatpush1.bf16.msra.mxu0 0
  %697 = vmatprep.subr.bf16.mxu0 0
  %698 = vmatpush1.bf16.msra.mxu0 0
  %699 = vmatprep.subr.bf16.mxu0 0
  %700 = vmatpush1.bf16.msra.mxu0 0
  %701 = vmatprep.subr.bf16.mxu0 0
  %702 = vmatpush1.bf16.msra.mxu0 0
  %703 = vmatprep.subr.bf16.mxu0 0
  %704 = vmatpush1.bf16.msra.mxu0 0
  %705 = vmatprep.subr.bf16.mxu0 0
  %706 = vmatpush1.bf16.msra.mxu0 0
  %707 = vmatprep.subr.bf16.mxu0 0
  %708 = vmatpush1.bf16.msra.mxu0 0
  %709 = vmatprep.subr.bf16.mxu0 0
  %710 = vmatpush1.bf16.msra.mxu0 0
  %711 = vmatprep.subr.bf16.mxu0 0
  %712 = vmatpush1.bf16.msra.mxu0 0
  %713 = vmatprep.subr.bf16.mxu0 0
  %714 = vmatpush1.bf16.msra.mxu0 0
  %715 = vmatprep.mubr.bf16.mxu0 0
  %716 = vmatmul.mubr.bf16.gmra.mrb[0].mxu0 %v554
  %v717 = vpop.f32.mrb[0].mxu0
  %v718 = vadd.f32 0.0, %v717
  %v719 = vpop.f32.mrb[0].mxu0
  %v720 = vadd.f32 0.0, %v719
  %v721 = vpop.f32.mrb[0].mxu0
  %v722 = vadd.f32 0.0, %v721
  %v723 = vpop.f32.mrb[0].mxu0
  %v724 = vadd.f32 0.0, %v723
  %725 = vmatprep.mubr.bf16.mxu0 0
  %726 = vmatmul.mubr.bf16.gmra.mrb[0].mxu0 %v557
  %v727 = vpop.f32.mrb[0].mxu0
  %v728 = vadd.f32 0.0, %v727
  %v729 = vpop.f32.mrb[0].mxu0
  %v730 = vadd.f32 0.0, %v729
  %v731 = vpop.f32.mrb[0].mxu0
  %v732 = vadd.f32 0.0, %v731
  %v733 = vpop.f32.mrb[0].mxu0
  %v734 = vadd.f32 0.0, %v733
  %735 = vdwg.mxu0
  %v736 = vadd.f32 %v356, %v612
  %v737 = vadd.f32 %v358, %v614
  %v738 = vadd.f32 %v409, %v665
  %v739 = vadd.f32 %v411, %v667
  %v740 = vadd.f32 %v462, %v718
  %v741 = vadd.f32 %v464, %v720
  %v742 = vadd.f32 %v360, %v616
  %v743 = vadd.f32 %v362, %v618
  %v744 = vadd.f32 %v413, %v669
  %v745 = vadd.f32 %v415, %v671
  %v746 = vadd.f32 %v466, %v722
  %v747 = vadd.f32 %v468, %v724
  %v748 = vadd.f32 %v366, %v622
  %v749 = vadd.f32 %v368, %v624
  %v750 = vadd.f32 %v419, %v675
  %v751 = vadd.f32 %v421, %v677
  %v752 = vadd.f32 %v472, %v728
  %v753 = vadd.f32 %v474, %v730
  %v754 = vadd.f32 %v370, %v626
  %v755 = vadd.f32 %v372, %v628
  %v756 = vadd.f32 %v423, %v679
  %v757 = vadd.f32 %v425, %v681
  %v758 = vadd.f32 %v476, %v732
  %v759 = vadd.f32 %v478, %v734
  %v760 = vld [vmem:[%s0] sm:$0xff]
  %v761 = vld [vmem:[%s0 + $0x8] sm:$0x3f]
  %s762 = scalar_lea.vmem %s1, 48
  %v763 = vld [vmem:[%s762] sm:$0xf]
  %v764 = vld [vmem:[%s762 + $0x4] sm:$0xf]
  %v765 = vld [vmem:[%s762 + $0x8] sm:$0xf]
  %v766 = vld [vmem:[%s762 + $0xc] sm:$0xf]
  %v771 = vunpack.c.l.b16 %v763
  %v772 = vunpack.c.l.b16 %v764
  %v773 = vunpack.c.l.b16 %v765
  %v774 = vunpack.c.l.b16 %v766
  %v775 = vpack.c.b16 %v772, %v771
  %v776 = vpack.c.b16 %v774, %v773
  %v779 = vcombine.high %v760, %v760
  %v781 = vunpack.c.l.s4 1983009808
  %v782 = vunpack.c.0.s8 %v781
  %v783 = vlaneseq
  %v784 = vshrl.u32 %v783, 7
  %v785 = vsub.s32 %v782, %v784
  %v786 = vrot.slane %v760, %v785
  %v788 = vunpack.c.l.s4 1983009808
  %v789 = vunpack.c.0.s8 %v788
  %v790 = vlaneseq
  %v791 = vshrl.u32 %v790, 7
  %v792 = vsub.s32 %v789, %v791
  %v793 = vrot.slane %v779, %v792
  %v794 = vcombine.high %v786, %v786
  %v795 = vcombine.high %v793, %v793
  %v796 = vcombine.high %v761, %v761
  %v798 = vunpack.c.l.s4 1983009808
  %v799 = vunpack.c.0.s8 %v798
  %v800 = vlaneseq
  %v801 = vshrl.u32 %v800, 7
  %v802 = vsub.s32 %v799, %v801
  %v803 = vrot.slane %v761, %v802
  %v805 = vunpack.c.l.s4 1983009808
  %v806 = vunpack.c.0.s8 %v805
  %v807 = vlaneseq
  %v808 = vshrl.u32 %v807, 7
  %v809 = vsub.s32 %v806, %v808
  %v810 = vrot.slane %v796, %v809
  %v811 = vcombine.high %v803, %v803
  %812 = vrot.lane.b32.xlu0 %v786, 110
  %v813 = vpop.permute.xlu0 %812
  %814 = vrot.lane.b32.xlu0 %v794, 110
  %v815 = vpop.permute.xlu0 %814
  %816 = vrot.lane.b32.xlu0 %v793, 110
  %v817 = vpop.permute.xlu0 %816
  %818 = vrot.lane.b32.xlu0 %v795, 110
  %v819 = vpop.permute.xlu0 %818
  %820 = vrot.lane.b32.xlu0 %v803, 110
  %v821 = vpop.permute.xlu0 %820
  %822 = vrot.lane.b32.xlu0 %v811, 110
  %v823 = vpop.permute.xlu0 %822
  %824 = vrot.lane.b32.xlu0 %v810, 110
  %v825 = vpop.permute.xlu0 %824
  %vm826 = vcmask 900096
  %v827 = vsel %vm826, %v813, %v815
  %v828 = vsel %vm826, %v815, %v817
  %v829 = vsel %vm826, %v817, %v819
  %v830 = vsel %vm826, %v819, %v821
  %v831 = vsel %vm826, %v821, %v823
  %v832 = vsel %vm826, %v823, %v825
  %v834 = vsel %vm93, %v775, 0
  %v837 = vsel %vm93, %v776, 0
  %v840 = vsel %vm100, %v827, 0
  %v843 = vsel %vm100, %v828, 0
  %v846 = vsel %vm100, %v829, 0
  %v849 = vsel %vm100, %v830, 0
  %v852 = vsel %vm100, %v831, 0
  %v855 = vsel %vm100, %v832, 0
  %857 = vmatprep.subr.bf16.mxu0 %v843
  %858 = vmatpush1.bf16.msra.mxu0 %v840
  %859 = vmatprep.subr.bf16.mxu0 0
  %860 = vmatpush1.bf16.msra.mxu0 0
  %861 = vmatprep.subr.bf16.mxu0 0
  %862 = vmatpush1.bf16.msra.mxu0 0
  %863 = vmatprep.subr.bf16.mxu0 0
  %864 = vmatpush1.bf16.msra.mxu0 0
  %865 = vmatprep.subr.bf16.mxu0 0
  %866 = vmatpush1.bf16.msra.mxu0 0
  %867 = vmatprep.subr.bf16.mxu0 0
  %868 = vmatpush1.bf16.msra.mxu0 0
  %869 = vmatprep.subr.bf16.mxu0 0
  %870 = vmatpush1.bf16.msra.mxu0 0
  %871 = vmatprep.subr.bf16.mxu0 0
  %872 = vmatpush1.bf16.msra.mxu0 0
  %873 = vmatprep.subr.bf16.mxu0 0
  %874 = vmatpush1.bf16.msra.mxu0 0
  %875 = vmatprep.subr.bf16.mxu0 0
  %876 = vmatpush1.bf16.msra.mxu0 0
  %877 = vmatprep.subr.bf16.mxu0 0
  %878 = vmatpush1.bf16.msra.mxu0 0
  %879 = vmatprep.subr.bf16.mxu0 0
  %880 = vmatpush1.bf16.msra.mxu0 0
  %881 = vmatprep.subr.bf16.mxu0 0
  %882 = vmatpush1.bf16.msra.mxu0 0
  %883 = vmatprep.subr.bf16.mxu0 0
  %884 = vmatpush1.bf16.msra.mxu0 0
  %885 = vmatprep.subr.bf16.mxu0 0
  %886 = vmatpush1.bf16.msra.mxu0 0
  %887 = vmatprep.subr.bf16.mxu0 0
  %888 = vmatpush1.bf16.msra.mxu0 0
  %889 = vmatprep.mubr.bf16.mxu0 0
  %890 = vmatmul.mubr.bf16.gmra.mrb[0].mxu0 %v834
  %v891 = vpop.f32.mrb[0].mxu0
  %v892 = vadd.f32 0.0, %v891
  %v893 = vpop.f32.mrb[0].mxu0
  %v894 = vadd.f32 0.0, %v893
  %v895 = vpop.f32.mrb[0].mxu0
  %v896 = vadd.f32 0.0, %v895
  %v897 = vpop.f32.mrb[0].mxu0
  %v898 = vadd.f32 0.0, %v897
  %899 = vmatprep.mubr.bf16.mxu0 0
  %900 = vmatmul.mubr.bf16.gmra.mrb[0].mxu0 %v837
  %v901 = vpop.f32.mrb[0].mxu0
  %v902 = vadd.f32 0.0, %v901
  %v903 = vpop.f32.mrb[0].mxu0
  %v904 = vadd.f32 0.0, %v903
  %v905 = vpop.f32.mrb[0].mxu0
  %v906 = vadd.f32 0.0, %v905
  %v907 = vpop.f32.mrb[0].mxu0
  %v908 = vadd.f32 0.0, %v907
  %909 = vdwg.mxu0
  %910 = vmatprep.subr.bf16.mxu0 %v849
  %911 = vmatpush1.bf16.msra.mxu0 %v846
  %912 = vmatprep.subr.bf16.mxu0 0
  %913 = vmatpush1.bf16.msra.mxu0 0
  %914 = vmatprep.subr.bf16.mxu0 0
  %915 = vmatpush1.bf16.msra.mxu0 0
  %916 = vmatprep.subr.bf16.mxu0 0
  %917 = vmatpush1.bf16.msra.mxu0 0
  %918 = vmatprep.subr.bf16.mxu0 0
  %919 = vmatpush1.bf16.msra.mxu0 0
  %920 = vmatprep.subr.bf16.mxu0 0
  %921 = vmatpush1.bf16.msra.mxu0 0
  %922 = vmatprep.subr.bf16.mxu0 0
  %923 = vmatpush1.bf16.msra.mxu0 0
  %924 = vmatprep.subr.bf16.mxu0 0
  %925 = vmatpush1.bf16.msra.mxu0 0
  %926 = vmatprep.subr.bf16.mxu0 0
  %927 = vmatpush1.bf16.msra.mxu0 0
  %928 = vmatprep.subr.bf16.mxu0 0
  %929 = vmatpush1.bf16.msra.mxu0 0
  %930 = vmatprep.subr.bf16.mxu0 0
  %931 = vmatpush1.bf16.msra.mxu0 0
  %932 = vmatprep.subr.bf16.mxu0 0
  %933 = vmatpush1.bf16.msra.mxu0 0
  %934 = vmatprep.subr.bf16.mxu0 0
  %935 = vmatpush1.bf16.msra.mxu0 0
  %936 = vmatprep.subr.bf16.mxu0 0
  %937 = vmatpush1.bf16.msra.mxu0 0
  %938 = vmatprep.subr.bf16.mxu0 0
  %939 = vmatpush1.bf16.msra.mxu0 0
  %940 = vmatprep.subr.bf16.mxu0 0
  %941 = vmatpush1.bf16.msra.mxu0 0
  %942 = vmatprep.mubr.bf16.mxu0 0
  %943 = vmatmul.mubr.bf16.gmra.mrb[0].mxu0 %v834
  %v944 = vpop.f32.mrb[0].mxu0
  %v945 = vadd.f32 0.0, %v944
  %v946 = vpop.f32.mrb[0].mxu0
  %v947 = vadd.f32 0.0, %v946
  %v948 = vpop.f32.mrb[0].mxu0
  %v949 = vadd.f32 0.0, %v948
  %v950 = vpop.f32.mrb[0].mxu0
  %v951 = vadd.f32 0.0, %v950
  %952 = vmatprep.mubr.bf16.mxu0 0
  %953 = vmatmul.mubr.bf16.gmra.mrb[0].mxu0 %v837
  %v954 = vpop.f32.mrb[0].mxu0
  %v955 = vadd.f32 0.0, %v954
  %v956 = vpop.f32.mrb[0].mxu0
  %v957 = vadd.f32 0.0, %v956
  %v958 = vpop.f32.mrb[0].mxu0
  %v959 = vadd.f32 0.0, %v958
  %v960 = vpop.f32.mrb[0].mxu0
  %v961 = vadd.f32 0.0, %v960
  %962 = vdwg.mxu0
  %963 = vmatprep.subr.bf16.mxu0 %v855
  %964 = vmatpush1.bf16.msra.mxu0 %v852
  %965 = vmatprep.subr.bf16.mxu0 0
  %966 = vmatpush1.bf16.msra.mxu0 0
  %967 = vmatprep.subr.bf16.mxu0 0
  %968 = vmatpush1.bf16.msra.mxu0 0
  %969 = vmatprep.subr.bf16.mxu0 0
  %970 = vmatpush1.bf16.msra.mxu0 0
  %971 = vmatprep.subr.bf16.mxu0 0
  %972 = vmatpush1.bf16.msra.mxu0 0
  %973 = vmatprep.subr.bf16.mxu0 0
  %974 = vmatpush1.bf16.msra.mxu0 0
  %975 = vmatprep.subr.bf16.mxu0 0
  %976 = vmatpush1.bf16.msra.mxu0 0
  %977 = vmatprep.subr.bf16.mxu0 0
  %978 = vmatpush1.bf16.msra.mxu0 0
  %979 = vmatprep.subr.bf16.mxu0 0
  %980 = vmatpush1.bf16.msra.mxu0 0
  %981 = vmatprep.subr.bf16.mxu0 0
  %982 = vmatpush1.bf16.msra.mxu0 0
  %983 = vmatprep.subr.bf16.mxu0 0
  %984 = vmatpush1.bf16.msra.mxu0 0
  %985 = vmatprep.subr.bf16.mxu0 0
  %986 = vmatpush1.bf16.msra.mxu0 0
  %987 = vmatprep.subr.bf16.mxu0 0
  %988 = vmatpush1.bf16.msra.mxu0 0
  %989 = vmatprep.subr.bf16.mxu0 0
  %990 = vmatpush1.bf16.msra.mxu0 0
  %991 = vmatprep.subr.bf16.mxu0 0
  %992 = vmatpush1.bf16.msra.mxu0 0
  %993 = vmatprep.subr.bf16.mxu0 0
  %994 = vmatpush1.bf16.msra.mxu0 0
  %995 = vmatprep.mubr.bf16.mxu0 0
  %996 = vmatmul.mubr.bf16.gmra.mrb[0].mxu0 %v834
  %v997 = vpop.f32.mrb[0].mxu0
  %v998 = vadd.f32 0.0, %v997
  %v999 = vpop.f32.mrb[0].mxu0
  %v1000 = vadd.f32 0.0, %v999
  %v1001 = vpop.f32.mrb[0].mxu0
  %v1002 = vadd.f32 0.0, %v1001
  %v1003 = vpop.f32.mrb[0].mxu0
  %v1004 = vadd.f32 0.0, %v1003
  %1005 = vmatprep.mubr.bf16.mxu0 0
  %1006 = vmatmul.mubr.bf16.gmra.mrb[0].mxu0 %v837
  %v1007 = vpop.f32.mrb[0].mxu0
  %v1008 = vadd.f32 0.0, %v1007
  %v1009 = vpop.f32.mrb[0].mxu0
  %v1010 = vadd.f32 0.0, %v1009
  %v1011 = vpop.f32.mrb[0].mxu0
  %v1012 = vadd.f32 0.0, %v1011
  %v1013 = vpop.f32.mrb[0].mxu0
  %v1014 = vadd.f32 0.0, %v1013
  %1015 = vdwg.mxu0
  %v1016 = vadd.f32 %v736, %v892
  %v1017 = vadd.f32 %v737, %v894
  %v1018 = vadd.f32 %v738, %v945
  %v1019 = vadd.f32 %v739, %v947
  %v1020 = vadd.f32 %v740, %v998
  %v1021 = vadd.f32 %v741, %v1000
  %v1022 = vadd.f32 %v742, %v896
  %v1023 = vadd.f32 %v743, %v898
  %v1024 = vadd.f32 %v744, %v949
  %v1025 = vadd.f32 %v745, %v951
  %v1026 = vadd.f32 %v746, %v1002
  %v1027 = vadd.f32 %v747, %v1004
  %v1028 = vadd.f32 %v748, %v902
  %v1029 = vadd.f32 %v749, %v904
  %v1030 = vadd.f32 %v750, %v955
  %v1031 = vadd.f32 %v751, %v957
  %v1032 = vadd.f32 %v752, %v1008
  %v1033 = vadd.f32 %v753, %v1010
  %v1034 = vadd.f32 %v754, %v906
  %v1035 = vadd.f32 %v755, %v908
  %v1036 = vadd.f32 %v756, %v959
  %v1037 = vadd.f32 %v757, %v961
  %v1038 = vadd.f32 %v758, %v1012
  %v1039 = vadd.f32 %v759, %v1014
  %v1040 = vld [vmem:[%s0] sm:$0xff]
  %v1041 = vld [vmem:[%s0 + $0x8] sm:$0x3f]
  %s1042 = scalar_lea.vmem %s1, 64
  %v1043 = vld [vmem:[%s1042] sm:$0xf]
  %v1044 = vld [vmem:[%s1042 + $0x4] sm:$0xf]
  %v1045 = vld [vmem:[%s1042 + $0x8] sm:$0xf]
  %v1046 = vld [vmem:[%s1042 + $0xc] sm:$0xf]
  %v1051 = vunpack.c.l.b16 %v1043
  %v1052 = vunpack.c.l.b16 %v1044
  %v1053 = vunpack.c.l.b16 %v1045
  %v1054 = vunpack.c.l.b16 %v1046
  %v1055 = vpack.c.b16 %v1052, %v1051
  %v1056 = vpack.c.b16 %v1054, %v1053
  %v1059 = vcombine.high %v1040, %v1040
  %v1061 = vunpack.c.l.s4 1983009808
  %v1062 = vunpack.c.0.s8 %v1061
  %v1063 = vlaneseq
  %v1064 = vshrl.u32 %v1063, 7
  %v1065 = vsub.s32 %v1062, %v1064
  %v1066 = vrot.slane %v1040, %v1065
  %v1068 = vunpack.c.l.s4 1983009808
  %v1069 = vunpack.c.0.s8 %v1068
  %v1070 = vlaneseq
  %v1071 = vshrl.u32 %v1070, 7
  %v1072 = vsub.s32 %v1069, %v1071
  %v1073 = vrot.slane %v1059, %v1072
  %v1074 = vcombine.high %v1066, %v1066
  %v1075 = vcombine.high %v1073, %v1073
  %v1076 = vcombine.high %v1041, %v1041
  %v1078 = vunpack.c.l.s4 1983009808
  %v1079 = vunpack.c.0.s8 %v1078
  %v1080 = vlaneseq
  %v1081 = vshrl.u32 %v1080, 7
  %v1082 = vsub.s32 %v1079, %v1081
  %v1083 = vrot.slane %v1041, %v1082
  %v1085 = vunpack.c.l.s4 1983009808
  %v1086 = vunpack.c.0.s8 %v1085
  %v1087 = vlaneseq
  %v1088 = vshrl.u32 %v1087, 7
  %v1089 = vsub.s32 %v1086, %v1088
  %v1090 = vrot.slane %v1076, %v1089
  %v1091 = vcombine.high %v1083, %v1083
  %1092 = vrot.lane.b32.xlu0 %v1066, 109
  %v1093 = vpop.permute.xlu0 %1092
  %1094 = vrot.lane.b32.xlu0 %v1074, 109
  %v1095 = vpop.permute.xlu0 %1094
  %1096 = vrot.lane.b32.xlu0 %v1073, 109
  %v1097 = vpop.permute.xlu0 %1096
  %1098 = vrot.lane.b32.xlu0 %v1075, 109
  %v1099 = vpop.permute.xlu0 %1098
  %1100 = vrot.lane.b32.xlu0 %v1083, 109
  %v1101 = vpop.permute.xlu0 %1100
  %1102 = vrot.lane.b32.xlu0 %v1091, 109
  %v1103 = vpop.permute.xlu0 %1102
  %1104 = vrot.lane.b32.xlu0 %v1090, 109
  %v1105 = vpop.permute.xlu0 %1104
  %vm1106 = vcmask 891904
  %v1107 = vsel %vm1106, %v1093, %v1095
  %v1108 = vsel %vm1106, %v1095, %v1097
  %v1109 = vsel %vm1106, %v1097, %v1099
  %v1110 = vsel %vm1106, %v1099, %v1101
  %v1111 = vsel %vm1106, %v1101, %v1103
  %v1112 = vsel %vm1106, %v1103, %v1105
  %v1114 = vsel %vm93, %v1055, 0
  %v1117 = vsel %vm93, %v1056, 0
  %v1120 = vsel %vm100, %v1107, 0
  %v1123 = vsel %vm100, %v1108, 0
  %v1126 = vsel %vm100, %v1109, 0
  %v1129 = vsel %vm100, %v1110, 0
  %v1132 = vsel %vm100, %v1111, 0
  %v1135 = vsel %vm100, %v1112, 0
  %1137 = vmatprep.subr.bf16.mxu0 %v1123
  %1138 = vmatpush1.bf16.msra.mxu0 %v1120
  %1139 = vmatprep.subr.bf16.mxu0 0
  %1140 = vmatpush1.bf16.msra.mxu0 0
  %1141 = vmatprep.subr.bf16.mxu0 0
  %1142 = vmatpush1.bf16.msra.mxu0 0
  %1143 = vmatprep.subr.bf16.mxu0 0
  %1144 = vmatpush1.bf16.msra.mxu0 0
  %1145 = vmatprep.subr.bf16.mxu0 0
  %1146 = vmatpush1.bf16.msra.mxu0 0
  %1147 = vmatprep.subr.bf16.mxu0 0
  %1148 = vmatpush1.bf16.msra.mxu0 0
  %1149 = vmatprep.subr.bf16.mxu0 0
  %1150 = vmatpush1.bf16.msra.mxu0 0
  %1151 = vmatprep.subr.bf16.mxu0 0
  %1152 = vmatpush1.bf16.msra.mxu0 0
  %1153 = vmatprep.subr.bf16.mxu0 0
  %1154 = vmatpush1.bf16.msra.mxu0 0
  %1155 = vmatprep.subr.bf16.mxu0 0
  %1156 = vmatpush1.bf16.msra.mxu0 0
  %1157 = vmatprep.subr.bf16.mxu0 0
  %1158 = vmatpush1.bf16.msra.mxu0 0
  %1159 = vmatprep.subr.bf16.mxu0 0
  %1160 = vmatpush1.bf16.msra.mxu0 0
  %1161 = vmatprep.subr.bf16.mxu0 0
  %1162 = vmatpush1.bf16.msra.mxu0 0
  %1163 = vmatprep.subr.bf16.mxu0 0
  %1164 = vmatpush1.bf16.msra.mxu0 0
  %1165 = vmatprep.subr.bf16.mxu0 0
  %1166 = vmatpush1.bf16.msra.mxu0 0
  %1167 = vmatprep.subr.bf16.mxu0 0
  %1168 = vmatpush1.bf16.msra.mxu0 0
  %1169 = vmatprep.mubr.bf16.mxu0 0
  %1170 = vmatmul.mubr.bf16.gmra.mrb[0].mxu0 %v1114
  %v1171 = vpop.f32.mrb[0].mxu0
  %v1172 = vadd.f32 0.0, %v1171
  %v1173 = vpop.f32.mrb[0].mxu0
  %v1174 = vadd.f32 0.0, %v1173
  %v1175 = vpop.f32.mrb[0].mxu0
  %v1176 = vadd.f32 0.0, %v1175
  %v1177 = vpop.f32.mrb[0].mxu0
  %v1178 = vadd.f32 0.0, %v1177
  %1179 = vmatprep.mubr.bf16.mxu0 0
  %1180 = vmatmul.mubr.bf16.gmra.mrb[0].mxu0 %v1117
  %v1181 = vpop.f32.mrb[0].mxu0
  %v1182 = vadd.f32 0.0, %v1181
  %v1183 = vpop.f32.mrb[0].mxu0
  %v1184 = vadd.f32 0.0, %v1183
  %v1185 = vpop.f32.mrb[0].mxu0
  %v1186 = vadd.f32 0.0, %v1185
  %v1187 = vpop.f32.mrb[0].mxu0
  %v1188 = vadd.f32 0.0, %v1187
  %1189 = vdwg.mxu0
  %1190 = vmatprep.subr.bf16.mxu0 %v1129
  %1191 = vmatpush1.bf16.msra.mxu0 %v1126
  %1192 = vmatprep.subr.bf16.mxu0 0
  %1193 = vmatpush1.bf16.msra.mxu0 0
  %1194 = vmatprep.subr.bf16.mxu0 0
  %1195 = vmatpush1.bf16.msra.mxu0 0
  %1196 = vmatprep.subr.bf16.mxu0 0
  %1197 = vmatpush1.bf16.msra.mxu0 0
  %1198 = vmatprep.subr.bf16.mxu0 0
  %1199 = vmatpush1.bf16.msra.mxu0 0
  %1200 = vmatprep.subr.bf16.mxu0 0
  %1201 = vmatpush1.bf16.msra.mxu0 0
  %1202 = vmatprep.subr.bf16.mxu0 0
  %1203 = vmatpush1.bf16.msra.mxu0 0
  %1204 = vmatprep.subr.bf16.mxu0 0
  %1205 = vmatpush1.bf16.msra.mxu0 0
  %1206 = vmatprep.subr.bf16.mxu0 0
  %1207 = vmatpush1.bf16.msra.mxu0 0
  %1208 = vmatprep.subr.bf16.mxu0 0
  %1209 = vmatpush1.bf16.msra.mxu0 0
  %1210 = vmatprep.subr.bf16.mxu0 0
  %1211 = vmatpush1.bf16.msra.mxu0 0
  %1212 = vmatprep.subr.bf16.mxu0 0
  %1213 = vmatpush1.bf16.msra.mxu0 0
  %1214 = vmatprep.subr.bf16.mxu0 0
  %1215 = vmatpush1.bf16.msra.mxu0 0
  %1216 = vmatprep.subr.bf16.mxu0 0
  %1217 = vmatpush1.bf16.msra.mxu0 0
  %1218 = vmatprep.subr.bf16.mxu0 0
  %1219 = vmatpush1.bf16.msra.mxu0 0
  %1220 = vmatprep.subr.bf16.mxu0 0
  %1221 = vmatpush1.bf16.msra.mxu0 0
  %1222 = vmatprep.mubr.bf16.mxu0 0
  %1223 = vmatmul.mubr.bf16.gmra.mrb[0].mxu0 %v1114
  %v1224 = vpop.f32.mrb[0].mxu0
  %v1225 = vadd.f32 0.0, %v1224
  %v1226 = vpop.f32.mrb[0].mxu0
  %v1227 = vadd.f32 0.0, %v1226
  %v1228 = vpop.f32.mrb[0].mxu0
  %v1229 = vadd.f32 0.0, %v1228
  %v1230 = vpop.f32.mrb[0].mxu0
  %v1231 = vadd.f32 0.0, %v1230
  %1232 = vmatprep.mubr.bf16.mxu0 0
  %1233 = vmatmul.mubr.bf16.gmra.mrb[0].mxu0 %v1117
  %v1234 = vpop.f32.mrb[0].mxu0
  %v1235 = vadd.f32 0.0, %v1234
  %v1236 = vpop.f32.mrb[0].mxu0
  %v1237 = vadd.f32 0.0, %v1236
  %v1238 = vpop.f32.mrb[0].mxu0
  %v1239 = vadd.f32 0.0, %v1238
  %v1240 = vpop.f32.mrb[0].mxu0
  %v1241 = vadd.f32 0.0, %v1240
  %1242 = vdwg.mxu0
  %1243 = vmatprep.subr.bf16.mxu0 %v1135
  %1244 = vmatpush1.bf16.msra.mxu0 %v1132
  %1245 = vmatprep.subr.bf16.mxu0 0
  %1246 = vmatpush1.bf16.msra.mxu0 0
  %1247 = vmatprep.subr.bf16.mxu0 0
  %1248 = vmatpush1.bf16.msra.mxu0 0
  %1249 = vmatprep.subr.bf16.mxu0 0
  %1250 = vmatpush1.bf16.msra.mxu0 0
  %1251 = vmatprep.subr.bf16.mxu0 0
  %1252 = vmatpush1.bf16.msra.mxu0 0
  %1253 = vmatprep.subr.bf16.mxu0 0
  %1254 = vmatpush1.bf16.msra.mxu0 0
  %1255 = vmatprep.subr.bf16.mxu0 0
  %1256 = vmatpush1.bf16.msra.mxu0 0
  %1257 = vmatprep.subr.bf16.mxu0 0
  %1258 = vmatpush1.bf16.msra.mxu0 0
  %1259 = vmatprep.subr.bf16.mxu0 0
  %1260 = vmatpush1.bf16.msra.mxu0 0
  %1261 = vmatprep.subr.bf16.mxu0 0
  %1262 = vmatpush1.bf16.msra.mxu0 0
  %1263 = vmatprep.subr.bf16.mxu0 0
  %1264 = vmatpush1.bf16.msra.mxu0 0
  %1265 = vmatprep.subr.bf16.mxu0 0
  %1266 = vmatpush1.bf16.msra.mxu0 0
  %1267 = vmatprep.subr.bf16.mxu0 0
  %1268 = vmatpush1.bf16.msra.mxu0 0
  %1269 = vmatprep.subr.bf16.mxu0 0
  %1270 = vmatpush1.bf16.msra.mxu0 0
  %1271 = vmatprep.subr.bf16.mxu0 0
  %1272 = vmatpush1.bf16.msra.mxu0 0
  %1273 = vmatprep.subr.bf16.mxu0 0
  %1274 = vmatpush1.bf16.msra.mxu0 0
  %1275 = vmatprep.mubr.bf16.mxu0 0
  %1276 = vmatmul.mubr.bf16.gmra.mrb[0].mxu0 %v1114
  %v1277 = vpop.f32.mrb[0].mxu0
  %v1278 = vadd.f32 0.0, %v1277
  %v1279 = vpop.f32.mrb[0].mxu0
  %v1280 = vadd.f32 0.0, %v1279
  %v1281 = vpop.f32.mrb[0].mxu0
  %v1282 = vadd.f32 0.0, %v1281
  %v1283 = vpop.f32.mrb[0].mxu0
  %v1284 = vadd.f32 0.0, %v1283
  %1285 = vmatprep.mubr.bf16.mxu0 0
  %1286 = vmatmul.mubr.bf16.gmra.mrb[0].mxu0 %v1117
  %v1287 = vpop.f32.mrb[0].mxu0
  %v1288 = vadd.f32 0.0, %v1287
  %v1289 = vpop.f32.mrb[0].mxu0
  %v1290 = vadd.f32 0.0, %v1289
  %v1291 = vpop.f32.mrb[0].mxu0
  %v1292 = vadd.f32 0.0, %v1291
  %v1293 = vpop.f32.mrb[0].mxu0
  %v1294 = vadd.f32 0.0, %v1293
  %1295 = vdwg.mxu0
  %v1296 = vadd.f32 %v1016, %v1172
  %v1297 = vadd.f32 %v1017, %v1174
  %v1298 = vadd.f32 %v1018, %v1225
  %v1299 = vadd.f32 %v1019, %v1227
  %v1300 = vadd.f32 %v1020, %v1278
  %v1301 = vadd.f32 %v1021, %v1280
  %v1302 = vadd.f32 %v1022, %v1176
  %v1303 = vadd.f32 %v1023, %v1178
  %v1304 = vadd.f32 %v1024, %v1229
  %v1305 = vadd.f32 %v1025, %v1231
  %v1306 = vadd.f32 %v1026, %v1282
  %v1307 = vadd.f32 %v1027, %v1284
  %v1308 = vadd.f32 %v1028, %v1182
  %v1309 = vadd.f32 %v1029, %v1184
  %v1310 = vadd.f32 %v1030, %v1235
  %v1311 = vadd.f32 %v1031, %v1237
  %v1312 = vadd.f32 %v1032, %v1288
  %v1313 = vadd.f32 %v1033, %v1290
  %v1314 = vadd.f32 %v1034, %v1186
  %v1315 = vadd.f32 %v1035, %v1188
  %v1316 = vadd.f32 %v1036, %v1239
  %v1317 = vadd.f32 %v1037, %v1241
  %v1318 = vadd.f32 %v1038, %v1292
  %v1319 = vadd.f32 %v1039, %v1294
  %v1320 = vld [vmem:[%s0] sm:$0xff]
  %v1321 = vld [vmem:[%s0 + $0x8] sm:$0x3f]
  %s1322 = scalar_lea.vmem %s1, 80
  %v1323 = vld [vmem:[%s1322] sm:$0xf]
  %v1324 = vld [vmem:[%s1322 + $0x4] sm:$0xf]
  %v1325 = vld [vmem:[%s1322 + $0x8] sm:$0xf]
  %v1326 = vld [vmem:[%s1322 + $0xc] sm:$0xf]
  %v1331 = vunpack.c.l.b16 %v1323
  %v1332 = vunpack.c.l.b16 %v1324
  %v1333 = vunpack.c.l.b16 %v1325
  %v1334 = vunpack.c.l.b16 %v1326
  %v1335 = vpack.c.b16 %v1332, %v1331
  %v1336 = vpack.c.b16 %v1334, %v1333
  %v1339 = vcombine.high %v1320, %v1320
  %v1341 = vunpack.c.l.s4 1983009808
  %v1342 = vunpack.c.0.s8 %v1341
  %v1343 = vlaneseq
  %v1344 = vshrl.u32 %v1343, 7
  %v1345 = vsub.s32 %v1342, %v1344
  %v1346 = vrot.slane %v1320, %v1345
  %v1348 = vunpack.c.l.s4 1983009808
  %v1349 = vunpack.c.0.s8 %v1348
  %v1350 = vlaneseq
  %v1351 = vshrl.u32 %v1350, 7
  %v1352 = vsub.s32 %v1349, %v1351
  %v1353 = vrot.slane %v1339, %v1352
  %v1354 = vcombine.high %v1346, %v1346
  %v1355 = vcombine.high %v1353, %v1353
  %v1356 = vcombine.high %v1321, %v1321
  %v1358 = vunpack.c.l.s4 1983009808
  %v1359 = vunpack.c.0.s8 %v1358
  %v1360 = vlaneseq
  %v1361 = vshrl.u32 %v1360, 7
  %v1362 = vsub.s32 %v1359, %v1361
  %v1363 = vrot.slane %v1321, %v1362
  %v1365 = vunpack.c.l.s4 1983009808
  %v1366 = vunpack.c.0.s8 %v1365
  %v1367 = vlaneseq
  %v1368 = vshrl.u32 %v1367, 7
  %v1369 = vsub.s32 %v1366, %v1368
  %v1370 = vrot.slane %v1356, %v1369
  %v1371 = vcombine.high %v1363, %v1363
  %1372 = vrot.lane.b32.xlu0 %v1346, 108
  %v1373 = vpop.permute.xlu0 %1372
  %1374 = vrot.lane.b32.xlu0 %v1354, 108
  %v1375 = vpop.permute.xlu0 %1374
  %1376 = vrot.lane.b32.xlu0 %v1353, 108
  %v1377 = vpop.permute.xlu0 %1376
  %1378 = vrot.lane.b32.xlu0 %v1355, 108
  %v1379 = vpop.permute.xlu0 %1378
  %1380 = vrot.lane.b32.xlu0 %v1363, 108
  %v1381 = vpop.permute.xlu0 %1380
  %1382 = vrot.lane.b32.xlu0 %v1371, 108
  %v1383 = vpop.permute.xlu0 %1382
  %1384 = vrot.lane.b32.xlu0 %v1370, 108
  %v1385 = vpop.permute.xlu0 %1384
  %vm1386 = vcmask 883712
  %v1387 = vsel %vm1386, %v1373, %v1375
  %v1388 = vsel %vm1386, %v1375, %v1377
  %v1389 = vsel %vm1386, %v1377, %v1379
  %v1390 = vsel %vm1386, %v1379, %v1381
  %v1391 = vsel %vm1386, %v1381, %v1383
  %v1392 = vsel %vm1386, %v1383, %v1385
  %v1394 = vsel %vm93, %v1335, 0
  %v1397 = vsel %vm93, %v1336, 0
  %v1400 = vsel %vm100, %v1387, 0
  %v1403 = vsel %vm100, %v1388, 0
  %v1406 = vsel %vm100, %v1389, 0
  %v1409 = vsel %vm100, %v1390, 0
  %v1412 = vsel %vm100, %v1391, 0
  %v1415 = vsel %vm100, %v1392, 0
  %1417 = vmatprep.subr.bf16.mxu0 %v1403
  %1418 = vmatpush1.bf16.msra.mxu0 %v1400
  %1419 = vmatprep.subr.bf16.mxu0 0
  %1420 = vmatpush1.bf16.msra.mxu0 0
  %1421 = vmatprep.subr.bf16.mxu0 0
  %1422 = vmatpush1.bf16.msra.mxu0 0
  %1423 = vmatprep.subr.bf16.mxu0 0
  %1424 = vmatpush1.bf16.msra.mxu0 0
  %1425 = vmatprep.subr.bf16.mxu0 0
  %1426 = vmatpush1.bf16.msra.mxu0 0
  %1427 = vmatprep.subr.bf16.mxu0 0
  %1428 = vmatpush1.bf16.msra.mxu0 0
  %1429 = vmatprep.subr.bf16.mxu0 0
  %1430 = vmatpush1.bf16.msra.mxu0 0
  %1431 = vmatprep.subr.bf16.mxu0 0
  %1432 = vmatpush1.bf16.msra.mxu0 0
  %1433 = vmatprep.subr.bf16.mxu0 0
  %1434 = vmatpush1.bf16.msra.mxu0 0
  %1435 = vmatprep.subr.bf16.mxu0 0
  %1436 = vmatpush1.bf16.msra.mxu0 0
  %1437 = vmatprep.subr.bf16.mxu0 0
  %1438 = vmatpush1.bf16.msra.mxu0 0
  %1439 = vmatprep.subr.bf16.mxu0 0
  %1440 = vmatpush1.bf16.msra.mxu0 0
  %1441 = vmatprep.subr.bf16.mxu0 0
  %1442 = vmatpush1.bf16.msra.mxu0 0
  %1443 = vmatprep.subr.bf16.mxu0 0
  %1444 = vmatpush1.bf16.msra.mxu0 0
  %1445 = vmatprep.subr.bf16.mxu0 0
  %1446 = vmatpush1.bf16.msra.mxu0 0
  %1447 = vmatprep.subr.bf16.mxu0 0
  %1448 = vmatpush1.bf16.msra.mxu0 0
  %1449 = vmatprep.mubr.bf16.mxu0 0
  %1450 = vmatmul.mubr.bf16.gmra.mrb[0].mxu0 %v1394
  %v1451 = vpop.f32.mrb[0].mxu0
  %v1452 = vadd.f32 0.0, %v1451
  %v1453 = vpop.f32.mrb[0].mxu0
  %v1454 = vadd.f32 0.0, %v1453
  %v1455 = vpop.f32.mrb[0].mxu0
  %v1456 = vadd.f32 0.0, %v1455
  %v1457 = vpop.f32.mrb[0].mxu0
  %v1458 = vadd.f32 0.0, %v1457
  %1459 = vmatprep.mubr.bf16.mxu0 0
  %1460 = vmatmul.mubr.bf16.gmra.mrb[0].mxu0 %v1397
  %v1461 = vpop.f32.mrb[0].mxu0
  %v1462 = vadd.f32 0.0, %v1461
  %v1463 = vpop.f32.mrb[0].mxu0
  %v1464 = vadd.f32 0.0, %v1463
  %v1465 = vpop.f32.mrb[0].mxu0
  %v1466 = vadd.f32 0.0, %v1465
  %v1467 = vpop.f32.mrb[0].mxu0
  %v1468 = vadd.f32 0.0, %v1467
  %1469 = vdwg.mxu0
  %1470 = vmatprep.subr.bf16.mxu0 %v1409
  %1471 = vmatpush1.bf16.msra.mxu0 %v1406
  %1472 = vmatprep.subr.bf16.mxu0 0
  %1473 = vmatpush1.bf16.msra.mxu0 0
  %1474 = vmatprep.subr.bf16.mxu0 0
  %1475 = vmatpush1.bf16.msra.mxu0 0
  %1476 = vmatprep.subr.bf16.mxu0 0
  %1477 = vmatpush1.bf16.msra.mxu0 0
  %1478 = vmatprep.subr.bf16.mxu0 0
  %1479 = vmatpush1.bf16.msra.mxu0 0
  %1480 = vmatprep.subr.bf16.mxu0 0
  %1481 = vmatpush1.bf16.msra.mxu0 0
  %1482 = vmatprep.subr.bf16.mxu0 0
  %1483 = vmatpush1.bf16.msra.mxu0 0
  %1484 = vmatprep.subr.bf16.mxu0 0
  %1485 = vmatpush1.bf16.msra.mxu0 0
  %1486 = vmatprep.subr.bf16.mxu0 0
  %1487 = vmatpush1.bf16.msra.mxu0 0
  %1488 = vmatprep.subr.bf16.mxu0 0
  %1489 = vmatpush1.bf16.msra.mxu0 0
  %1490 = vmatprep.subr.bf16.mxu0 0
  %1491 = vmatpush1.bf16.msra.mxu0 0
  %1492 = vmatprep.subr.bf16.mxu0 0
  %1493 = vmatpush1.bf16.msra.mxu0 0
  %1494 = vmatprep.subr.bf16.mxu0 0
  %1495 = vmatpush1.bf16.msra.mxu0 0
  %1496 = vmatprep.subr.bf16.mxu0 0
  %1497 = vmatpush1.bf16.msra.mxu0 0
  %1498 = vmatprep.subr.bf16.mxu0 0
  %1499 = vmatpush1.bf16.msra.mxu0 0
  %1500 = vmatprep.subr.bf16.mxu0 0
  %1501 = vmatpush1.bf16.msra.mxu0 0
  %1502 = vmatprep.mubr.bf16.mxu0 0
  %1503 = vmatmul.mubr.bf16.gmra.mrb[0].mxu0 %v1394
  %v1504 = vpop.f32.mrb[0].mxu0
  %v1505 = vadd.f32 0.0, %v1504
  %v1506 = vpop.f32.mrb[0].mxu0
  %v1507 = vadd.f32 0.0, %v1506
  %v1508 = vpop.f32.mrb[0].mxu0
  %v1509 = vadd.f32 0.0, %v1508
  %v1510 = vpop.f32.mrb[0].mxu0
  %v1511 = vadd.f32 0.0, %v1510
  %1512 = vmatprep.mubr.bf16.mxu0 0
  %1513 = vmatmul.mubr.bf16.gmra.mrb[0].mxu0 %v1397
  %v1514 = vpop.f32.mrb[0].mxu0
  %v1515 = vadd.f32 0.0, %v1514
  %v1516 = vpop.f32.mrb[0].mxu0
  %v1517 = vadd.f32 0.0, %v1516
  %v1518 = vpop.f32.mrb[0].mxu0
  %v1519 = vadd.f32 0.0, %v1518
  %v1520 = vpop.f32.mrb[0].mxu0
  %v1521 = vadd.f32 0.0, %v1520
  %1522 = vdwg.mxu0
  %1523 = vmatprep.subr.bf16.mxu0 %v1415
  %1524 = vmatpush1.bf16.msra.mxu0 %v1412
  %1525 = vmatprep.subr.bf16.mxu0 0
  %1526 = vmatpush1.bf16.msra.mxu0 0
  %1527 = vmatprep.subr.bf16.mxu0 0
  %1528 = vmatpush1.bf16.msra.mxu0 0
  %1529 = vmatprep.subr.bf16.mxu0 0
  %1530 = vmatpush1.bf16.msra.mxu0 0
  %1531 = vmatprep.subr.bf16.mxu0 0
  %1532 = vmatpush1.bf16.msra.mxu0 0
  %1533 = vmatprep.subr.bf16.mxu0 0
  %1534 = vmatpush1.bf16.msra.mxu0 0
  %1535 = vmatprep.subr.bf16.mxu0 0
  %1536 = vmatpush1.bf16.msra.mxu0 0
  %1537 = vmatprep.subr.bf16.mxu0 0
  %1538 = vmatpush1.bf16.msra.mxu0 0
  %1539 = vmatprep.subr.bf16.mxu0 0
  %1540 = vmatpush1.bf16.msra.mxu0 0
  %1541 = vmatprep.subr.bf16.mxu0 0
  %1542 = vmatpush1.bf16.msra.mxu0 0
  %1543 = vmatprep.subr.bf16.mxu0 0
  %1544 = vmatpush1.bf16.msra.mxu0 0
  %1545 = vmatprep.subr.bf16.mxu0 0
  %1546 = vmatpush1.bf16.msra.mxu0 0
  %1547 = vmatprep.subr.bf16.mxu0 0
  %1548 = vmatpush1.bf16.msra.mxu0 0
  %1549 = vmatprep.subr.bf16.mxu0 0
  %1550 = vmatpush1.bf16.msra.mxu0 0
  %1551 = vmatprep.subr.bf16.mxu0 0
  %1552 = vmatpush1.bf16.msra.mxu0 0
  %1553 = vmatprep.subr.bf16.mxu0 0
  %1554 = vmatpush1.bf16.msra.mxu0 0
  %1555 = vmatprep.mubr.bf16.mxu0 0
  %1556 = vmatmul.mubr.bf16.gmra.mrb[0].mxu0 %v1394
  %v1557 = vpop.f32.mrb[0].mxu0
  %v1558 = vadd.f32 0.0, %v1557
  %v1559 = vpop.f32.mrb[0].mxu0
  %v1560 = vadd.f32 0.0, %v1559
  %v1561 = vpop.f32.mrb[0].mxu0
  %v1562 = vadd.f32 0.0, %v1561
  %v1563 = vpop.f32.mrb[0].mxu0
  %v1564 = vadd.f32 0.0, %v1563
  %1565 = vmatprep.mubr.bf16.mxu0 0
  %1566 = vmatmul.mubr.bf16.gmra.mrb[0].mxu0 %v1397
  %v1567 = vpop.f32.mrb[0].mxu0
  %v1568 = vadd.f32 0.0, %v1567
  %v1569 = vpop.f32.mrb[0].mxu0
  %v1570 = vadd.f32 0.0, %v1569
  %v1571 = vpop.f32.mrb[0].mxu0
  %v1572 = vadd.f32 0.0, %v1571
  %v1573 = vpop.f32.mrb[0].mxu0
  %v1574 = vadd.f32 0.0, %v1573
  %1575 = vdwg.mxu0
  %v1576 = vadd.f32 %v1296, %v1452
  %v1577 = vadd.f32 %v1297, %v1454
  %v1578 = vadd.f32 %v1298, %v1505
  %v1579 = vadd.f32 %v1299, %v1507
  %v1580 = vadd.f32 %v1300, %v1558
  %v1581 = vadd.f32 %v1301, %v1560
  %v1582 = vadd.f32 %v1302, %v1456
  %v1583 = vadd.f32 %v1303, %v1458
  %v1584 = vadd.f32 %v1304, %v1509
  %v1585 = vadd.f32 %v1305, %v1511
  %v1586 = vadd.f32 %v1306, %v1562
  %v1587 = vadd.f32 %v1307, %v1564
  %v1588 = vadd.f32 %v1308, %v1462
  %v1589 = vadd.f32 %v1309, %v1464
  %v1590 = vadd.f32 %v1310, %v1515
  %v1591 = vadd.f32 %v1311, %v1517
  %v1592 = vadd.f32 %v1312, %v1568
  %v1593 = vadd.f32 %v1313, %v1570
  %v1594 = vadd.f32 %v1314, %v1466
  %v1595 = vadd.f32 %v1315, %v1468
  %v1596 = vadd.f32 %v1316, %v1519
  %v1597 = vadd.f32 %v1317, %v1521
  %v1598 = vadd.f32 %v1318, %v1572
  %v1599 = vadd.f32 %v1319, %v1574
  %v1600 = vld [vmem:[%s0] sm:$0xff]
  %v1601 = vld [vmem:[%s0 + $0x8] sm:$0x3f]
  %s1602 = scalar_lea.vmem %s1, 96
  %v1603 = vld [vmem:[%s1602] sm:$0xf]
  %v1604 = vld [vmem:[%s1602 + $0x4] sm:$0xf]
  %v1605 = vld [vmem:[%s1602 + $0x8] sm:$0xf]
  %v1606 = vld [vmem:[%s1602 + $0xc] sm:$0xf]
  %v1611 = vunpack.c.l.b16 %v1603
  %v1612 = vunpack.c.l.b16 %v1604
  %v1613 = vunpack.c.l.b16 %v1605
  %v1614 = vunpack.c.l.b16 %v1606
  %v1615 = vpack.c.b16 %v1612, %v1611
  %v1616 = vpack.c.b16 %v1614, %v1613
  %v1619 = vcombine.high %v1600, %v1600
  %v1621 = vunpack.c.l.s4 1983009808
  %v1622 = vunpack.c.0.s8 %v1621
  %v1623 = vlaneseq
  %v1624 = vshrl.u32 %v1623, 7
  %v1625 = vsub.s32 %v1622, %v1624
  %v1626 = vrot.slane %v1600, %v1625
  %v1628 = vunpack.c.l.s4 1983009808
  %v1629 = vunpack.c.0.s8 %v1628
  %v1630 = vlaneseq
  %v1631 = vshrl.u32 %v1630, 7
  %v1632 = vsub.s32 %v1629, %v1631
  %v1633 = vrot.slane %v1619, %v1632
  %v1634 = vcombine.high %v1626, %v1626
  %v1635 = vcombine.high %v1633, %v1633
  %v1636 = vcombine.high %v1601, %v1601
  %v1638 = vunpack.c.l.s4 1983009808
  %v1639 = vunpack.c.0.s8 %v1638
  %v1640 = vlaneseq
  %v1641 = vshrl.u32 %v1640, 7
  %v1642 = vsub.s32 %v1639, %v1641
  %v1643 = vrot.slane %v1601, %v1642
  %v1645 = vunpack.c.l.s4 1983009808
  %v1646 = vunpack.c.0.s8 %v1645
  %v1647 = vlaneseq
  %v1648 = vshrl.u32 %v1647, 7
  %v1649 = vsub.s32 %v1646, %v1648
  %v1650 = vrot.slane %v1636, %v1649
  %v1651 = vcombine.high %v1643, %v1643
  %1652 = vrot.lane.b32.xlu0 %v1626, 92
  %v1653 = vpop.permute.xlu0 %1652
  %1654 = vrot.lane.b32.xlu0 %v1634, 92
  %v1655 = vpop.permute.xlu0 %1654
  %1656 = vrot.lane.b32.xlu0 %v1633, 92
  %v1657 = vpop.permute.xlu0 %1656
  %1658 = vrot.lane.b32.xlu0 %v1635, 92
  %v1659 = vpop.permute.xlu0 %1658
  %1660 = vrot.lane.b32.xlu0 %v1643, 92
  %v1661 = vpop.permute.xlu0 %1660
  %1662 = vrot.lane.b32.xlu0 %v1651, 92
  %v1663 = vpop.permute.xlu0 %1662
  %1664 = vrot.lane.b32.xlu0 %v1650, 92
  %v1665 = vpop.permute.xlu0 %1664
  %vm1666 = vcmask 752640
  %v1667 = vsel %vm1666, %v1653, %v1655
  %v1668 = vsel %vm1666, %v1655, %v1657
  %v1669 = vsel %vm1666, %v1657, %v1659
  %v1670 = vsel %vm1666, %v1659, %v1661
  %v1671 = vsel %vm1666, %v1661, %v1663
  %v1672 = vsel %vm1666, %v1663, %v1665
  %v1674 = vsel %vm93, %v1615, 0
  %v1677 = vsel %vm93, %v1616, 0
  %v1680 = vsel %vm100, %v1667, 0
  %v1683 = vsel %vm100, %v1668, 0
  %v1686 = vsel %vm100, %v1669, 0
  %v1689 = vsel %vm100, %v1670, 0
  %v1692 = vsel %vm100, %v1671, 0
  %v1695 = vsel %vm100, %v1672, 0
  %1697 = vmatprep.subr.bf16.mxu0 %v1683
  %1698 = vmatpush1.bf16.msra.mxu0 %v1680
  %1699 = vmatprep.subr.bf16.mxu0 0
  %1700 = vmatpush1.bf16.msra.mxu0 0
  %1701 = vmatprep.subr.bf16.mxu0 0
  %1702 = vmatpush1.bf16.msra.mxu0 0
  %1703 = vmatprep.subr.bf16.mxu0 0
  %1704 = vmatpush1.bf16.msra.mxu0 0
  %1705 = vmatprep.subr.bf16.mxu0 0
  %1706 = vmatpush1.bf16.msra.mxu0 0
  %1707 = vmatprep.subr.bf16.mxu0 0
  %1708 = vmatpush1.bf16.msra.mxu0 0
  %1709 = vmatprep.subr.bf16.mxu0 0
  %1710 = vmatpush1.bf16.msra.mxu0 0
  %1711 = vmatprep.subr.bf16.mxu0 0
  %1712 = vmatpush1.bf16.msra.mxu0 0
  %1713 = vmatprep.subr.bf16.mxu0 0
  %1714 = vmatpush1.bf16.msra.mxu0 0
  %1715 = vmatprep.subr.bf16.mxu0 0
  %1716 = vmatpush1.bf16.msra.mxu0 0
  %1717 = vmatprep.subr.bf16.mxu0 0
  %1718 = vmatpush1.bf16.msra.mxu0 0
  %1719 = vmatprep.subr.bf16.mxu0 0
  %1720 = vmatpush1.bf16.msra.mxu0 0
  %1721 = vmatprep.subr.bf16.mxu0 0
  %1722 = vmatpush1.bf16.msra.mxu0 0
  %1723 = vmatprep.subr.bf16.mxu0 0
  %1724 = vmatpush1.bf16.msra.mxu0 0
  %1725 = vmatprep.subr.bf16.mxu0 0
  %1726 = vmatpush1.bf16.msra.mxu0 0
  %1727 = vmatprep.subr.bf16.mxu0 0
  %1728 = vmatpush1.bf16.msra.mxu0 0
  %1729 = vmatprep.mubr.bf16.mxu0 0
  %1730 = vmatmul.mubr.bf16.gmra.mrb[0].mxu0 %v1674
  %v1731 = vpop.f32.mrb[0].mxu0
  %v1732 = vadd.f32 0.0, %v1731
  %v1733 = vpop.f32.mrb[0].mxu0
  %v1734 = vadd.f32 0.0, %v1733
  %v1735 = vpop.f32.mrb[0].mxu0
  %v1736 = vadd.f32 0.0, %v1735
  %v1737 = vpop.f32.mrb[0].mxu0
  %v1738 = vadd.f32 0.0, %v1737
  %1739 = vmatprep.mubr.bf16.mxu0 0
  %1740 = vmatmul.mubr.bf16.gmra.mrb[0].mxu0 %v1677
  %v1741 = vpop.f32.mrb[0].mxu0
  %v1742 = vadd.f32 0.0, %v1741
  %v1743 = vpop.f32.mrb[0].mxu0
  %v1744 = vadd.f32 0.0, %v1743
  %v1745 = vpop.f32.mrb[0].mxu0
  %v1746 = vadd.f32 0.0, %v1745
  %v1747 = vpop.f32.mrb[0].mxu0
  %v1748 = vadd.f32 0.0, %v1747
  %1749 = vdwg.mxu0
  %1750 = vmatprep.subr.bf16.mxu0 %v1689
  %1751 = vmatpush1.bf16.msra.mxu0 %v1686
  %1752 = vmatprep.subr.bf16.mxu0 0
  %1753 = vmatpush1.bf16.msra.mxu0 0
  %1754 = vmatprep.subr.bf16.mxu0 0
  %1755 = vmatpush1.bf16.msra.mxu0 0
  %1756 = vmatprep.subr.bf16.mxu0 0
  %1757 = vmatpush1.bf16.msra.mxu0 0
  %1758 = vmatprep.subr.bf16.mxu0 0
  %1759 = vmatpush1.bf16.msra.mxu0 0
  %1760 = vmatprep.subr.bf16.mxu0 0
  %1761 = vmatpush1.bf16.msra.mxu0 0
  %1762 = vmatprep.subr.bf16.mxu0 0
  %1763 = vmatpush1.bf16.msra.mxu0 0
  %1764 = vmatprep.subr.bf16.mxu0 0
  %1765 = vmatpush1.bf16.msra.mxu0 0
  %1766 = vmatprep.subr.bf16.mxu0 0
  %1767 = vmatpush1.bf16.msra.mxu0 0
  %1768 = vmatprep.subr.bf16.mxu0 0
  %1769 = vmatpush1.bf16.msra.mxu0 0
  %1770 = vmatprep.subr.bf16.mxu0 0
  %1771 = vmatpush1.bf16.msra.mxu0 0
  %1772 = vmatprep.subr.bf16.mxu0 0
  %1773 = vmatpush1.bf16.msra.mxu0 0
  %1774 = vmatprep.subr.bf16.mxu0 0
  %1775 = vmatpush1.bf16.msra.mxu0 0
  %1776 = vmatprep.subr.bf16.mxu0 0
  %1777 = vmatpush1.bf16.msra.mxu0 0
  %1778 = vmatprep.subr.bf16.mxu0 0
  %1779 = vmatpush1.bf16.msra.mxu0 0
  %1780 = vmatprep.subr.bf16.mxu0 0
  %1781 = vmatpush1.bf16.msra.mxu0 0
  %1782 = vmatprep.mubr.bf16.mxu0 0
  %1783 = vmatmul.mubr.bf16.gmra.mrb[0].mxu0 %v1674
  %v1784 = vpop.f32.mrb[0].mxu0
  %v1785 = vadd.f32 0.0, %v1784
  %v1786 = vpop.f32.mrb[0].mxu0
  %v1787 = vadd.f32 0.0, %v1786
  %v1788 = vpop.f32.mrb[0].mxu0
  %v1789 = vadd.f32 0.0, %v1788
  %v1790 = vpop.f32.mrb[0].mxu0
  %v1791 = vadd.f32 0.0, %v1790
  %1792 = vmatprep.mubr.bf16.mxu0 0
  %1793 = vmatmul.mubr.bf16.gmra.mrb[0].mxu0 %v1677
  %v1794 = vpop.f32.mrb[0].mxu0
  %v1795 = vadd.f32 0.0, %v1794
  %v1796 = vpop.f32.mrb[0].mxu0
  %v1797 = vadd.f32 0.0, %v1796
  %v1798 = vpop.f32.mrb[0].mxu0
  %v1799 = vadd.f32 0.0, %v1798
  %v1800 = vpop.f32.mrb[0].mxu0
  %v1801 = vadd.f32 0.0, %v1800
  %1802 = vdwg.mxu0
  %1803 = vmatprep.subr.bf16.mxu0 %v1695
  %1804 = vmatpush1.bf16.msra.mxu0 %v1692
  %1805 = vmatprep.subr.bf16.mxu0 0
  %1806 = vmatpush1.bf16.msra.mxu0 0
  %1807 = vmatprep.subr.bf16.mxu0 0
  %1808 = vmatpush1.bf16.msra.mxu0 0
  %1809 = vmatprep.subr.bf16.mxu0 0
  %1810 = vmatpush1.bf16.msra.mxu0 0
  %1811 = vmatprep.subr.bf16.mxu0 0
  %1812 = vmatpush1.bf16.msra.mxu0 0
  %1813 = vmatprep.subr.bf16.mxu0 0
  %1814 = vmatpush1.bf16.msra.mxu0 0
  %1815 = vmatprep.subr.bf16.mxu0 0
  %1816 = vmatpush1.bf16.msra.mxu0 0
  %1817 = vmatprep.subr.bf16.mxu0 0
  %1818 = vmatpush1.bf16.msra.mxu0 0
  %1819 = vmatprep.subr.bf16.mxu0 0
  %1820 = vmatpush1.bf16.msra.mxu0 0
  %1821 = vmatprep.subr.bf16.mxu0 0
  %1822 = vmatpush1.bf16.msra.mxu0 0
  %1823 = vmatprep.subr.bf16.mxu0 0
  %1824 = vmatpush1.bf16.msra.mxu0 0
  %1825 = vmatprep.subr.bf16.mxu0 0
  %1826 = vmatpush1.bf16.msra.mxu0 0
  %1827 = vmatprep.subr.bf16.mxu0 0
  %1828 = vmatpush1.bf16.msra.mxu0 0
  %1829 = vmatprep.subr.bf16.mxu0 0
  %1830 = vmatpush1.bf16.msra.mxu0 0
  %1831 = vmatprep.subr.bf16.mxu0 0
  %1832 = vmatpush1.bf16.msra.mxu0 0
  %1833 = vmatprep.subr.bf16.mxu0 0
  %1834 = vmatpush1.bf16.msra.mxu0 0
  %1835 = vmatprep.mubr.bf16.mxu0 0
  %1836 = vmatmul.mubr.bf16.gmra.mrb[0].mxu0 %v1674
  %v1837 = vpop.f32.mrb[0].mxu0
  %v1838 = vadd.f32 0.0, %v1837
  %v1839 = vpop.f32.mrb[0].mxu0
  %v1840 = vadd.f32 0.0, %v1839
  %v1841 = vpop.f32.mrb[0].mxu0
  %v1842 = vadd.f32 0.0, %v1841
  %v1843 = vpop.f32.mrb[0].mxu0
  %v1844 = vadd.f32 0.0, %v1843
  %1845 = vmatprep.mubr.bf16.mxu0 0
  %1846 = vmatmul.mubr.bf16.gmra.mrb[0].mxu0 %v1677
  %v1847 = vpop.f32.mrb[0].mxu0
  %v1848 = vadd.f32 0.0, %v1847
  %v1849 = vpop.f32.mrb[0].mxu0
  %v1850 = vadd.f32 0.0, %v1849
  %v1851 = vpop.f32.mrb[0].mxu0
  %v1852 = vadd.f32 0.0, %v1851
  %v1853 = vpop.f32.mrb[0].mxu0
  %v1854 = vadd.f32 0.0, %v1853
  %1855 = vdwg.mxu0
  %v1856 = vadd.f32 %v1576, %v1732
  %v1857 = vadd.f32 %v1577, %v1734
  %v1858 = vadd.f32 %v1578, %v1785
  %v1859 = vadd.f32 %v1579, %v1787
  %v1860 = vadd.f32 %v1580, %v1838
  %v1861 = vadd.f32 %v1581, %v1840
  %v1862 = vadd.f32 %v1582, %v1736
  %v1863 = vadd.f32 %v1583, %v1738
  %v1864 = vadd.f32 %v1584, %v1789
  %v1865 = vadd.f32 %v1585, %v1791
  %v1866 = vadd.f32 %v1586, %v1842
  %v1867 = vadd.f32 %v1587, %v1844
  %v1868 = vadd.f32 %v1588, %v1742
  %v1869 = vadd.f32 %v1589, %v1744
  %v1870 = vadd.f32 %v1590, %v1795
  %v1871 = vadd.f32 %v1591, %v1797
  %v1872 = vadd.f32 %v1592, %v1848
  %v1873 = vadd.f32 %v1593, %v1850
  %v1874 = vadd.f32 %v1594, %v1746
  %v1875 = vadd.f32 %v1595, %v1748
  %v1876 = vadd.f32 %v1596, %v1799
  %v1877 = vadd.f32 %v1597, %v1801
  %v1878 = vadd.f32 %v1598, %v1852
  %v1879 = vadd.f32 %v1599, %v1854
  %v1880 = vld [vmem:[%s0] sm:$0xff]
  %v1881 = vld [vmem:[%s0 + $0x8] sm:$0x3f]
  %s1882 = scalar_lea.vmem %s1, 112
  %v1883 = vld [vmem:[%s1882] sm:$0xf]
  %v1884 = vld [vmem:[%s1882 + $0x4] sm:$0xf]
  %v1885 = vld [vmem:[%s1882 + $0x8] sm:$0xf]
  %v1886 = vld [vmem:[%s1882 + $0xc] sm:$0xf]
  %v1891 = vunpack.c.l.b16 %v1883
  %v1892 = vunpack.c.l.b16 %v1884
  %v1893 = vunpack.c.l.b16 %v1885
  %v1894 = vunpack.c.l.b16 %v1886
  %v1895 = vpack.c.b16 %v1892, %v1891
  %v1896 = vpack.c.b16 %v1894, %v1893
  %v1899 = vcombine.high %v1880, %v1880
  %v1901 = vunpack.c.l.s4 1983009808
  %v1902 = vunpack.c.0.s8 %v1901
  %v1903 = vlaneseq
  %v1904 = vshrl.u32 %v1903, 7
  %v1905 = vsub.s32 %v1902, %v1904
  %v1906 = vrot.slane %v1880, %v1905
  %v1908 = vunpack.c.l.s4 1983009808
  %v1909 = vunpack.c.0.s8 %v1908
  %v1910 = vlaneseq
  %v1911 = vshrl.u32 %v1910, 7
  %v1912 = vsub.s32 %v1909, %v1911
  %v1913 = vrot.slane %v1899, %v1912
  %v1914 = vcombine.high %v1906, %v1906
  %v1915 = vcombine.high %v1913, %v1913
  %v1916 = vcombine.high %v1881, %v1881
  %v1918 = vunpack.c.l.s4 1983009808
  %v1919 = vunpack.c.0.s8 %v1918
  %v1920 = vlaneseq
  %v1921 = vshrl.u32 %v1920, 7
  %v1922 = vsub.s32 %v1919, %v1921
  %v1923 = vrot.slane %v1881, %v1922
  %v1925 = vunpack.c.l.s4 1983009808
  %v1926 = vunpack.c.0.s8 %v1925
  %v1927 = vlaneseq
  %v1928 = vshrl.u32 %v1927, 7
  %v1929 = vsub.s32 %v1926, %v1928
  %v1930 = vrot.slane %v1916, %v1929
  %v1931 = vcombine.high %v1923, %v1923
  %1932 = vrot.lane.b32.xlu0 %v1906, 91
  %v1933 = vpop.permute.xlu0 %1932
  %1934 = vrot.lane.b32.xlu0 %v1914, 91
  %v1935 = vpop.permute.xlu0 %1934
  %1936 = vrot.lane.b32.xlu0 %v1913, 91
  %v1937 = vpop.permute.xlu0 %1936
  %1938 = vrot.lane.b32.xlu0 %v1915, 91
  %v1939 = vpop.permute.xlu0 %1938
  %1940 = vrot.lane.b32.xlu0 %v1923, 91
  %v1941 = vpop.permute.xlu0 %1940
  %1942 = vrot.lane.b32.xlu0 %v1931, 91
  %v1943 = vpop.permute.xlu0 %1942
  %1944 = vrot.lane.b32.xlu0 %v1930, 91
  %v1945 = vpop.permute.xlu0 %1944
  %vm1946 = vcmask 744448
  %v1947 = vsel %vm1946, %v1933, %v1935
  %v1948 = vsel %vm1946, %v1935, %v1937
  %v1949 = vsel %vm1946, %v1937, %v1939
  %v1950 = vsel %vm1946, %v1939, %v1941
  %v1951 = vsel %vm1946, %v1941, %v1943
  %v1952 = vsel %vm1946, %v1943, %v1945
  %v1954 = vsel %vm93, %v1895, 0
  %v1957 = vsel %vm93, %v1896, 0
  %v1960 = vsel %vm100, %v1947, 0
  %v1963 = vsel %vm100, %v1948, 0
  %v1966 = vsel %vm100, %v1949, 0
  %v1969 = vsel %vm100, %v1950, 0
  %v1972 = vsel %vm100, %v1951, 0
  %v1975 = vsel %vm100, %v1952, 0
  %1977 = vmatprep.subr.bf16.mxu0 %v1963
  %1978 = vmatpush1.bf16.msra.mxu0 %v1960
  %1979 = vmatprep.subr.bf16.mxu0 0
  %1980 = vmatpush1.bf16.msra.mxu0 0
  %1981 = vmatprep.subr.bf16.mxu0 0
  %1982 = vmatpush1.bf16.msra.mxu0 0
  %1983 = vmatprep.subr.bf16.mxu0 0
  %1984 = vmatpush1.bf16.msra.mxu0 0
  %1985 = vmatprep.subr.bf16.mxu0 0
  %1986 = vmatpush1.bf16.msra.mxu0 0
  %1987 = vmatprep.subr.bf16.mxu0 0
  %1988 = vmatpush1.bf16.msra.mxu0 0
  %1989 = vmatprep.subr.bf16.mxu0 0
  %1990 = vmatpush1.bf16.msra.mxu0 0
  %1991 = vmatprep.subr.bf16.mxu0 0
  %1992 = vmatpush1.bf16.msra.mxu0 0
  %1993 = vmatprep.subr.bf16.mxu0 0
  %1994 = vmatpush1.bf16.msra.mxu0 0
  %1995 = vmatprep.subr.bf16.mxu0 0
  %1996 = vmatpush1.bf16.msra.mxu0 0
  %1997 = vmatprep.subr.bf16.mxu0 0
  %1998 = vmatpush1.bf16.msra.mxu0 0
  %1999 = vmatprep.subr.bf16.mxu0 0
  %2000 = vmatpush1.bf16.msra.mxu0 0
  %2001 = vmatprep.subr.bf16.mxu0 0
  %2002 = vmatpush1.bf16.msra.mxu0 0
  %2003 = vmatprep.subr.bf16.mxu0 0
  %2004 = vmatpush1.bf16.msra.mxu0 0
  %2005 = vmatprep.subr.bf16.mxu0 0
  %2006 = vmatpush1.bf16.msra.mxu0 0
  %2007 = vmatprep.subr.bf16.mxu0 0
  %2008 = vmatpush1.bf16.msra.mxu0 0
  %2009 = vmatprep.mubr.bf16.mxu0 0
  %2010 = vmatmul.mubr.bf16.gmra.mrb[0].mxu0 %v1954
  %v2011 = vpop.f32.mrb[0].mxu0
  %v2012 = vadd.f32 0.0, %v2011
  %v2013 = vpop.f32.mrb[0].mxu0
  %v2014 = vadd.f32 0.0, %v2013
  %v2015 = vpop.f32.mrb[0].mxu0
  %v2016 = vadd.f32 0.0, %v2015
  %v2017 = vpop.f32.mrb[0].mxu0
  %v2018 = vadd.f32 0.0, %v2017
  %2019 = vmatprep.mubr.bf16.mxu0 0
  %2020 = vmatmul.mubr.bf16.gmra.mrb[0].mxu0 %v1957
  %v2021 = vpop.f32.mrb[0].mxu0
  %v2022 = vadd.f32 0.0, %v2021
  %v2023 = vpop.f32.mrb[0].mxu0
  %v2024 = vadd.f32 0.0, %v2023
  %v2025 = vpop.f32.mrb[0].mxu0
  %v2026 = vadd.f32 0.0, %v2025
  %v2027 = vpop.f32.mrb[0].mxu0
  %v2028 = vadd.f32 0.0, %v2027
  %2029 = vdwg.mxu0
  %2030 = vmatprep.subr.bf16.mxu0 %v1969
  %2031 = vmatpush1.bf16.msra.mxu0 %v1966
  %2032 = vmatprep.subr.bf16.mxu0 0
  %2033 = vmatpush1.bf16.msra.mxu0 0
  %2034 = vmatprep.subr.bf16.mxu0 0
  %2035 = vmatpush1.bf16.msra.mxu0 0
  %2036 = vmatprep.subr.bf16.mxu0 0
  %2037 = vmatpush1.bf16.msra.mxu0 0
  %2038 = vmatprep.subr.bf16.mxu0 0
  %2039 = vmatpush1.bf16.msra.mxu0 0
  %2040 = vmatprep.subr.bf16.mxu0 0
  %2041 = vmatpush1.bf16.msra.mxu0 0
  %2042 = vmatprep.subr.bf16.mxu0 0
  %2043 = vmatpush1.bf16.msra.mxu0 0
  %2044 = vmatprep.subr.bf16.mxu0 0
  %2045 = vmatpush1.bf16.msra.mxu0 0
  %2046 = vmatprep.subr.bf16.mxu0 0
  %2047 = vmatpush1.bf16.msra.mxu0 0
  %2048 = vmatprep.subr.bf16.mxu0 0
  %2049 = vmatpush1.bf16.msra.mxu0 0
  %2050 = vmatprep.subr.bf16.mxu0 0
  %2051 = vmatpush1.bf16.msra.mxu0 0
  %2052 = vmatprep.subr.bf16.mxu0 0
  %2053 = vmatpush1.bf16.msra.mxu0 0
  %2054 = vmatprep.subr.bf16.mxu0 0
  %2055 = vmatpush1.bf16.msra.mxu0 0
  %2056 = vmatprep.subr.bf16.mxu0 0
  %2057 = vmatpush1.bf16.msra.mxu0 0
  %2058 = vmatprep.subr.bf16.mxu0 0
  %2059 = vmatpush1.bf16.msra.mxu0 0
  %2060 = vmatprep.subr.bf16.mxu0 0
  %2061 = vmatpush1.bf16.msra.mxu0 0
  %2062 = vmatprep.mubr.bf16.mxu0 0
  %2063 = vmatmul.mubr.bf16.gmra.mrb[0].mxu0 %v1954
  %v2064 = vpop.f32.mrb[0].mxu0
  %v2065 = vadd.f32 0.0, %v2064
  %v2066 = vpop.f32.mrb[0].mxu0
  %v2067 = vadd.f32 0.0, %v2066
  %v2068 = vpop.f32.mrb[0].mxu0
  %v2069 = vadd.f32 0.0, %v2068
  %v2070 = vpop.f32.mrb[0].mxu0
  %v2071 = vadd.f32 0.0, %v2070
  %2072 = vmatprep.mubr.bf16.mxu0 0
  %2073 = vmatmul.mubr.bf16.gmra.mrb[0].mxu0 %v1957
  %v2074 = vpop.f32.mrb[0].mxu0
  %v2075 = vadd.f32 0.0, %v2074
  %v2076 = vpop.f32.mrb[0].mxu0
  %v2077 = vadd.f32 0.0, %v2076
  %v2078 = vpop.f32.mrb[0].mxu0
  %v2079 = vadd.f32 0.0, %v2078
  %v2080 = vpop.f32.mrb[0].mxu0
  %v2081 = vadd.f32 0.0, %v2080
  %2082 = vdwg.mxu0
  %2083 = vmatprep.subr.bf16.mxu0 %v1975
  %2084 = vmatpush1.bf16.msra.mxu0 %v1972
  %2085 = vmatprep.subr.bf16.mxu0 0
  %2086 = vmatpush1.bf16.msra.mxu0 0
  %2087 = vmatprep.subr.bf16.mxu0 0
  %2088 = vmatpush1.bf16.msra.mxu0 0
  %2089 = vmatprep.subr.bf16.mxu0 0
  %2090 = vmatpush1.bf16.msra.mxu0 0
  %2091 = vmatprep.subr.bf16.mxu0 0
  %2092 = vmatpush1.bf16.msra.mxu0 0
  %2093 = vmatprep.subr.bf16.mxu0 0
  %2094 = vmatpush1.bf16.msra.mxu0 0
  %2095 = vmatprep.subr.bf16.mxu0 0
  %2096 = vmatpush1.bf16.msra.mxu0 0
  %2097 = vmatprep.subr.bf16.mxu0 0
  %2098 = vmatpush1.bf16.msra.mxu0 0
  %2099 = vmatprep.subr.bf16.mxu0 0
  %2100 = vmatpush1.bf16.msra.mxu0 0
  %2101 = vmatprep.subr.bf16.mxu0 0
  %2102 = vmatpush1.bf16.msra.mxu0 0
  %2103 = vmatprep.subr.bf16.mxu0 0
  %2104 = vmatpush1.bf16.msra.mxu0 0
  %2105 = vmatprep.subr.bf16.mxu0 0
  %2106 = vmatpush1.bf16.msra.mxu0 0
  %2107 = vmatprep.subr.bf16.mxu0 0
  %2108 = vmatpush1.bf16.msra.mxu0 0
  %2109 = vmatprep.subr.bf16.mxu0 0
  %2110 = vmatpush1.bf16.msra.mxu0 0
  %2111 = vmatprep.subr.bf16.mxu0 0
  %2112 = vmatpush1.bf16.msra.mxu0 0
  %2113 = vmatprep.subr.bf16.mxu0 0
  %2114 = vmatpush1.bf16.msra.mxu0 0
  %2115 = vmatprep.mubr.bf16.mxu0 0
  %2116 = vmatmul.mubr.bf16.gmra.mrb[0].mxu0 %v1954
  %v2117 = vpop.f32.mrb[0].mxu0
  %v2118 = vadd.f32 0.0, %v2117
  %v2119 = vpop.f32.mrb[0].mxu0
  %v2120 = vadd.f32 0.0, %v2119
  %v2121 = vpop.f32.mrb[0].mxu0
  %v2122 = vadd.f32 0.0, %v2121
  %v2123 = vpop.f32.mrb[0].mxu0
  %v2124 = vadd.f32 0.0, %v2123
  %2125 = vmatprep.mubr.bf16.mxu0 0
  %2126 = vmatmul.mubr.bf16.gmra.mrb[0].mxu0 %v1957
  %v2127 = vpop.f32.mrb[0].mxu0
  %v2128 = vadd.f32 0.0, %v2127
  %v2129 = vpop.f32.mrb[0].mxu0
  %v2130 = vadd.f32 0.0, %v2129
  %v2131 = vpop.f32.mrb[0].mxu0
  %v2132 = vadd.f32 0.0, %v2131
  %v2133 = vpop.f32.mrb[0].mxu0
  %v2134 = vadd.f32 0.0, %v2133
  %2135 = vdwg.mxu0
  %v2136 = vadd.f32 %v1856, %v2012
  %v2137 = vadd.f32 %v1857, %v2014
  %v2138 = vadd.f32 %v1858, %v2065
  %v2139 = vadd.f32 %v1859, %v2067
  %v2140 = vadd.f32 %v1860, %v2118
  %v2141 = vadd.f32 %v1861, %v2120
  %v2142 = vadd.f32 %v1862, %v2016
  %v2143 = vadd.f32 %v1863, %v2018
  %v2144 = vadd.f32 %v1864, %v2069
  %v2145 = vadd.f32 %v1865, %v2071
  %v2146 = vadd.f32 %v1866, %v2122
  %v2147 = vadd.f32 %v1867, %v2124
  %v2148 = vadd.f32 %v1868, %v2022
  %v2149 = vadd.f32 %v1869, %v2024
  %v2150 = vadd.f32 %v1870, %v2075
  %v2151 = vadd.f32 %v1871, %v2077
  %v2152 = vadd.f32 %v1872, %v2128
  %v2153 = vadd.f32 %v1873, %v2130
  %v2154 = vadd.f32 %v1874, %v2026
  %v2155 = vadd.f32 %v1875, %v2028
  %v2156 = vadd.f32 %v1876, %v2079
  %v2157 = vadd.f32 %v1877, %v2081
  %v2158 = vadd.f32 %v1878, %v2132
  %v2159 = vadd.f32 %v1879, %v2134
  %v2160 = vld [vmem:[%s0] sm:$0xff]
  %v2161 = vld [vmem:[%s0 + $0x8] sm:$0x3f]
  %s2162 = scalar_lea.vmem %s1, 128
  %v2163 = vld [vmem:[%s2162] sm:$0xf]
  %v2164 = vld [vmem:[%s2162 + $0x4] sm:$0xf]
  %v2165 = vld [vmem:[%s2162 + $0x8] sm:$0xf]
  %v2166 = vld [vmem:[%s2162 + $0xc] sm:$0xf]
  %v2171 = vunpack.c.l.b16 %v2163
  %v2172 = vunpack.c.l.b16 %v2164
  %v2173 = vunpack.c.l.b16 %v2165
  %v2174 = vunpack.c.l.b16 %v2166
  %v2175 = vpack.c.b16 %v2172, %v2171
  %v2176 = vpack.c.b16 %v2174, %v2173
  %v2179 = vcombine.high %v2160, %v2160
  %v2181 = vunpack.c.l.s4 1983009808
  %v2182 = vunpack.c.0.s8 %v2181
  %v2183 = vlaneseq
  %v2184 = vshrl.u32 %v2183, 7
  %v2185 = vsub.s32 %v2182, %v2184
  %v2186 = vrot.slane %v2160, %v2185
  %v2188 = vunpack.c.l.s4 1983009808
  %v2189 = vunpack.c.0.s8 %v2188
  %v2190 = vlaneseq
  %v2191 = vshrl.u32 %v2190, 7
  %v2192 = vsub.s32 %v2189, %v2191
  %v2193 = vrot.slane %v2179, %v2192
  %v2194 = vcombine.high %v2186, %v2186
  %v2195 = vcombine.high %v2193, %v2193
  %v2196 = vcombine.high %v2161, %v2161
  %v2198 = vunpack.c.l.s4 1983009808
  %v2199 = vunpack.c.0.s8 %v2198
  %v2200 = vlaneseq
  %v2201 = vshrl.u32 %v2200, 7
  %v2202 = vsub.s32 %v2199, %v2201
  %v2203 = vrot.slane %v2161, %v2202
  %v2205 = vunpack.c.l.s4 1983009808
  %v2206 = vunpack.c.0.s8 %v2205
  %v2207 = vlaneseq
  %v2208 = vshrl.u32 %v2207, 7
  %v2209 = vsub.s32 %v2206, %v2208
  %v2210 = vrot.slane %v2196, %v2209
  %v2211 = vcombine.high %v2203, %v2203
  %2212 = vrot.lane.b32.xlu0 %v2186, 90
  %v2213 = vpop.permute.xlu0 %2212
  %2214 = vrot.lane.b32.xlu0 %v2194, 90
  %v2215 = vpop.permute.xlu0 %2214
  %2216 = vrot.lane.b32.xlu0 %v2193, 90
  %v2217 = vpop.permute.xlu0 %2216
  %2218 = vrot.lane.b32.xlu0 %v2195, 90
  %v2219 = vpop.permute.xlu0 %2218
  %2220 = vrot.lane.b32.xlu0 %v2203, 90
  %v2221 = vpop.permute.xlu0 %2220
  %2222 = vrot.lane.b32.xlu0 %v2211, 90
  %v2223 = vpop.permute.xlu0 %2222
  %2224 = vrot.lane.b32.xlu0 %v2210, 90
  %v2225 = vpop.permute.xlu0 %2224
  %vm2226 = vcmask 736256
  %v2227 = vsel %vm2226, %v2213, %v2215
  %v2228 = vsel %vm2226, %v2215, %v2217
  %v2229 = vsel %vm2226, %v2217, %v2219
  %v2230 = vsel %vm2226, %v2219, %v2221
  %v2231 = vsel %vm2226, %v2221, %v2223
  %v2232 = vsel %vm2226, %v2223, %v2225
  %v2234 = vsel %vm93, %v2175, 0
  %v2237 = vsel %vm93, %v2176, 0
  %v2240 = vsel %vm100, %v2227, 0
  %v2243 = vsel %vm100, %v2228, 0
  %v2246 = vsel %vm100, %v2229, 0
  %v2249 = vsel %vm100, %v2230, 0
  %v2252 = vsel %vm100, %v2231, 0
  %v2255 = vsel %vm100, %v2232, 0
  %2257 = vmatprep.subr.bf16.mxu0 %v2243
  %2258 = vmatpush1.bf16.msra.mxu0 %v2240
  %2259 = vmatprep.subr.bf16.mxu0 0
  %2260 = vmatpush1.bf16.msra.mxu0 0
  %2261 = vmatprep.subr.bf16.mxu0 0
  %2262 = vmatpush1.bf16.msra.mxu0 0
  %2263 = vmatprep.subr.bf16.mxu0 0
  %2264 = vmatpush1.bf16.msra.mxu0 0
  %2265 = vmatprep.subr.bf16.mxu0 0
  %2266 = vmatpush1.bf16.msra.mxu0 0
  %2267 = vmatprep.subr.bf16.mxu0 0
  %2268 = vmatpush1.bf16.msra.mxu0 0
  %2269 = vmatprep.subr.bf16.mxu0 0
  %2270 = vmatpush1.bf16.msra.mxu0 0
  %2271 = vmatprep.subr.bf16.mxu0 0
  %2272 = vmatpush1.bf16.msra.mxu0 0
  %2273 = vmatprep.subr.bf16.mxu0 0
  %2274 = vmatpush1.bf16.msra.mxu0 0
  %2275 = vmatprep.subr.bf16.mxu0 0
  %2276 = vmatpush1.bf16.msra.mxu0 0
  %2277 = vmatprep.subr.bf16.mxu0 0
  %2278 = vmatpush1.bf16.msra.mxu0 0
  %2279 = vmatprep.subr.bf16.mxu0 0
  %2280 = vmatpush1.bf16.msra.mxu0 0
  %2281 = vmatprep.subr.bf16.mxu0 0
  %2282 = vmatpush1.bf16.msra.mxu0 0
  %2283 = vmatprep.subr.bf16.mxu0 0
  %2284 = vmatpush1.bf16.msra.mxu0 0
  %2285 = vmatprep.subr.bf16.mxu0 0
  %2286 = vmatpush1.bf16.msra.mxu0 0
  %2287 = vmatprep.subr.bf16.mxu0 0
  %2288 = vmatpush1.bf16.msra.mxu0 0
  %2289 = vmatprep.mubr.bf16.mxu0 0
  %2290 = vmatmul.mubr.bf16.gmra.mrb[0].mxu0 %v2234
  %v2291 = vpop.f32.mrb[0].mxu0
  %v2292 = vadd.f32 0.0, %v2291
  %v2293 = vpop.f32.mrb[0].mxu0
  %v2294 = vadd.f32 0.0, %v2293
  %v2295 = vpop.f32.mrb[0].mxu0
  %v2296 = vadd.f32 0.0, %v2295
  %v2297 = vpop.f32.mrb[0].mxu0
  %v2298 = vadd.f32 0.0, %v2297
  %2299 = vmatprep.mubr.bf16.mxu0 0
  %2300 = vmatmul.mubr.bf16.gmra.mrb[0].mxu0 %v2237
  %v2301 = vpop.f32.mrb[0].mxu0
  %v2302 = vadd.f32 0.0, %v2301
  %v2303 = vpop.f32.mrb[0].mxu0
  %v2304 = vadd.f32 0.0, %v2303
  %v2305 = vpop.f32.mrb[0].mxu0
  %v2306 = vadd.f32 0.0, %v2305
  %v2307 = vpop.f32.mrb[0].mxu0
  %v2308 = vadd.f32 0.0, %v2307
  %2309 = vdwg.mxu0
  %2310 = vmatprep.subr.bf16.mxu0 %v2249
  %2311 = vmatpush1.bf16.msra.mxu0 %v2246
  %2312 = vmatprep.subr.bf16.mxu0 0
  %2313 = vmatpush1.bf16.msra.mxu0 0
  %2314 = vmatprep.subr.bf16.mxu0 0
  %2315 = vmatpush1.bf16.msra.mxu0 0
  %2316 = vmatprep.subr.bf16.mxu0 0
  %2317 = vmatpush1.bf16.msra.mxu0 0
  %2318 = vmatprep.subr.bf16.mxu0 0
  %2319 = vmatpush1.bf16.msra.mxu0 0
  %2320 = vmatprep.subr.bf16.mxu0 0
  %2321 = vmatpush1.bf16.msra.mxu0 0
  %2322 = vmatprep.subr.bf16.mxu0 0
  %2323 = vmatpush1.bf16.msra.mxu0 0
  %2324 = vmatprep.subr.bf16.mxu0 0
  %2325 = vmatpush1.bf16.msra.mxu0 0
  %2326 = vmatprep.subr.bf16.mxu0 0
  %2327 = vmatpush1.bf16.msra.mxu0 0
  %2328 = vmatprep.subr.bf16.mxu0 0
  %2329 = vmatpush1.bf16.msra.mxu0 0
  %2330 = vmatprep.subr.bf16.mxu0 0
  %2331 = vmatpush1.bf16.msra.mxu0 0
  %2332 = vmatprep.subr.bf16.mxu0 0
  %2333 = vmatpush1.bf16.msra.mxu0 0
  %2334 = vmatprep.subr.bf16.mxu0 0
  %2335 = vmatpush1.bf16.msra.mxu0 0
  %2336 = vmatprep.subr.bf16.mxu0 0
  %2337 = vmatpush1.bf16.msra.mxu0 0
  %2338 = vmatprep.subr.bf16.mxu0 0
  %2339 = vmatpush1.bf16.msra.mxu0 0
  %2340 = vmatprep.subr.bf16.mxu0 0
  %2341 = vmatpush1.bf16.msra.mxu0 0
  %2342 = vmatprep.mubr.bf16.mxu0 0
  %2343 = vmatmul.mubr.bf16.gmra.mrb[0].mxu0 %v2234
  %v2344 = vpop.f32.mrb[0].mxu0
  %v2345 = vadd.f32 0.0, %v2344
  %v2346 = vpop.f32.mrb[0].mxu0
  %v2347 = vadd.f32 0.0, %v2346
  %v2348 = vpop.f32.mrb[0].mxu0
  %v2349 = vadd.f32 0.0, %v2348
  %v2350 = vpop.f32.mrb[0].mxu0
  %v2351 = vadd.f32 0.0, %v2350
  %2352 = vmatprep.mubr.bf16.mxu0 0
  %2353 = vmatmul.mubr.bf16.gmra.mrb[0].mxu0 %v2237
  %v2354 = vpop.f32.mrb[0].mxu0
  %v2355 = vadd.f32 0.0, %v2354
  %v2356 = vpop.f32.mrb[0].mxu0
  %v2357 = vadd.f32 0.0, %v2356
  %v2358 = vpop.f32.mrb[0].mxu0
  %v2359 = vadd.f32 0.0, %v2358
  %v2360 = vpop.f32.mrb[0].mxu0
  %v2361 = vadd.f32 0.0, %v2360
  %2362 = vdwg.mxu0
  %2363 = vmatprep.subr.bf16.mxu0 %v2255
  %2364 = vmatpush1.bf16.msra.mxu0 %v2252
  %2365 = vmatprep.subr.bf16.mxu0 0
  %2366 = vmatpush1.bf16.msra.mxu0 0
  %2367 = vmatprep.subr.bf16.mxu0 0
  %2368 = vmatpush1.bf16.msra.mxu0 0
  %2369 = vmatprep.subr.bf16.mxu0 0
  %2370 = vmatpush1.bf16.msra.mxu0 0
  %2371 = vmatprep.subr.bf16.mxu0 0
  %2372 = vmatpush1.bf16.msra.mxu0 0
  %2373 = vmatprep.subr.bf16.mxu0 0
  %2374 = vmatpush1.bf16.msra.mxu0 0
  %2375 = vmatprep.subr.bf16.mxu0 0
  %2376 = vmatpush1.bf16.msra.mxu0 0
  %2377 = vmatprep.subr.bf16.mxu0 0
  %2378 = vmatpush1.bf16.msra.mxu0 0
  %2379 = vmatprep.subr.bf16.mxu0 0
  %2380 = vmatpush1.bf16.msra.mxu0 0
  %2381 = vmatprep.subr.bf16.mxu0 0
  %2382 = vmatpush1.bf16.msra.mxu0 0
  %2383 = vmatprep.subr.bf16.mxu0 0
  %2384 = vmatpush1.bf16.msra.mxu0 0
  %2385 = vmatprep.subr.bf16.mxu0 0
  %2386 = vmatpush1.bf16.msra.mxu0 0
  %2387 = vmatprep.subr.bf16.mxu0 0
  %2388 = vmatpush1.bf16.msra.mxu0 0
  %2389 = vmatprep.subr.bf16.mxu0 0
  %2390 = vmatpush1.bf16.msra.mxu0 0
  %2391 = vmatprep.subr.bf16.mxu0 0
  %2392 = vmatpush1.bf16.msra.mxu0 0
  %2393 = vmatprep.subr.bf16.mxu0 0
  %2394 = vmatpush1.bf16.msra.mxu0 0
  %2395 = vmatprep.mubr.bf16.mxu0 0
  %2396 = vmatmul.mubr.bf16.gmra.mrb[0].mxu0 %v2234
  %v2397 = vpop.f32.mrb[0].mxu0
  %v2398 = vadd.f32 0.0, %v2397
  %v2399 = vpop.f32.mrb[0].mxu0
  %v2400 = vadd.f32 0.0, %v2399
  %v2401 = vpop.f32.mrb[0].mxu0
  %v2402 = vadd.f32 0.0, %v2401
  %v2403 = vpop.f32.mrb[0].mxu0
  %v2404 = vadd.f32 0.0, %v2403
  %2405 = vmatprep.mubr.bf16.mxu0 0
  %2406 = vmatmul.mubr.bf16.gmra.mrb[0].mxu0 %v2237
  %v2407 = vpop.f32.mrb[0].mxu0
  %v2408 = vadd.f32 0.0, %v2407
  %v2409 = vpop.f32.mrb[0].mxu0
  %v2410 = vadd.f32 0.0, %v2409
  %v2411 = vpop.f32.mrb[0].mxu0
  %v2412 = vadd.f32 0.0, %v2411
  %v2413 = vpop.f32.mrb[0].mxu0
  %v2414 = vadd.f32 0.0, %v2413
  %2415 = vdwg.mxu0
  %v2416 = vadd.f32 %v2136, %v2292
  %v2417 = vadd.f32 %v2137, %v2294
  %v2418 = vadd.f32 %v2138, %v2345
  %v2419 = vadd.f32 %v2139, %v2347
  %v2420 = vadd.f32 %v2140, %v2398
  %v2421 = vadd.f32 %v2141, %v2400
  %v2422 = vadd.f32 %v2142, %v2296
  %v2423 = vadd.f32 %v2143, %v2298
  %v2424 = vadd.f32 %v2144, %v2349
  %v2425 = vadd.f32 %v2145, %v2351
  %v2426 = vadd.f32 %v2146, %v2402
  %v2427 = vadd.f32 %v2147, %v2404
  %v2428 = vadd.f32 %v2148, %v2302
  %v2429 = vadd.f32 %v2149, %v2304
  %v2430 = vadd.f32 %v2150, %v2355
  %v2431 = vadd.f32 %v2151, %v2357
  %v2432 = vadd.f32 %v2152, %v2408
  %v2433 = vadd.f32 %v2153, %v2410
  %v2434 = vadd.f32 %v2154, %v2306
  %v2435 = vadd.f32 %v2155, %v2308
  %v2436 = vadd.f32 %v2156, %v2359
  %v2437 = vadd.f32 %v2157, %v2361
  %v2438 = vadd.f32 %v2158, %v2412
  %v2439 = vadd.f32 %v2159, %v2414
  %v2440 = vld [vmem:[%s2] sm:$0xff]
  %v2441 = vld [vmem:[%s2 + $0x8] sm:$0xff]
  %v2442 = vld [vmem:[%s2 + $0x10] sm:$0xff]
  %v2443 = vld [vmem:[%s2 + $0x18] sm:$0xff]
  %2445 = vset.pattern.permute.xlu0 0
  %2446 = vperm.xlu0 %2445, %v2440
  %v2447 = vpop.permute.xlu0 %2446
  %2450 = vset.pattern.permute.xlu0 0
  %2451 = vperm.xlu0 %2450, %v2441
  %v2452 = vpop.permute.xlu0 %2451
  %2455 = vset.pattern.permute.xlu0 0
  %2456 = vperm.xlu0 %2455, %v2442
  %v2457 = vpop.permute.xlu0 %2456
  %2460 = vset.pattern.permute.xlu0 0
  %2461 = vperm.xlu0 %2460, %v2443
  %v2462 = vpop.permute.xlu0 %2461
  %v2464 = vadd.f32 %v2416, %v2447
  %v2465 = vadd.f32 %v2417, %v2447
  %v2466 = vadd.f32 %v2418, %v2447
  %v2467 = vadd.f32 %v2419, %v2447
  %v2468 = vadd.f32 %v2420, %v2447
  %v2469 = vadd.f32 %v2421, %v2447
  %v2470 = vadd.f32 %v2422, %v2452
  %v2471 = vadd.f32 %v2423, %v2452
  %v2472 = vadd.f32 %v2424, %v2452
  %v2473 = vadd.f32 %v2425, %v2452
  %v2474 = vadd.f32 %v2426, %v2452
  %v2475 = vadd.f32 %v2427, %v2452
  %v2476 = vadd.f32 %v2428, %v2457
  %v2477 = vadd.f32 %v2429, %v2457
  %v2478 = vadd.f32 %v2430, %v2457
  %v2479 = vadd.f32 %v2431, %v2457
  %v2480 = vadd.f32 %v2432, %v2457
  %v2481 = vadd.f32 %v2433, %v2457
  %v2482 = vadd.f32 %v2434, %v2462
  %v2483 = vadd.f32 %v2435, %v2462
  %v2484 = vadd.f32 %v2436, %v2462
  %v2485 = vadd.f32 %v2437, %v2462
  %v2486 = vadd.f32 %v2438, %v2462
  %v2487 = vadd.f32 %v2439, %v2462
  %2488 = vst [vmem:[%s3] sm:$0xff] %v2464
  %2489 = vst [vmem:[%s3 + $0x8] sm:$0xff] %v2465
  %2490 = vst [vmem:[%s3 + $0x10] sm:$0xff] %v2466
  %2491 = vst [vmem:[%s3 + $0x18] sm:$0xff] %v2467
  %2492 = vst [vmem:[%s3 + $0x20] sm:$0xff] %v2468
  %2493 = vst [vmem:[%s3 + $0x28] sm:$0xff] %v2469
  %2494 = vst [vmem:[%s3 + $0x30] sm:$0xff] %v2470
  %2495 = vst [vmem:[%s3 + $0x38] sm:$0xff] %v2471
  %2496 = vst [vmem:[%s3 + $0x40] sm:$0xff] %v2472
  %2497 = vst [vmem:[%s3 + $0x48] sm:$0xff] %v2473
  %2498 = vst [vmem:[%s3 + $0x50] sm:$0xff] %v2474
  %2499 = vst [vmem:[%s3 + $0x58] sm:$0xff] %v2475
  %2500 = vst [vmem:[%s3 + $0x60] sm:$0xff] %v2476
  %2501 = vst [vmem:[%s3 + $0x68] sm:$0xff] %v2477
  %2502 = vst [vmem:[%s3 + $0x70] sm:$0xff] %v2478
  %2503 = vst [vmem:[%s3 + $0x78] sm:$0xff] %v2479
  %2504 = vst [vmem:[%s3 + $0x80] sm:$0xff] %v2480
  %2505 = vst [vmem:[%s3 + $0x88] sm:$0xff] %v2481
  %2506 = vst [vmem:[%s3 + $0x90] sm:$0xff] %v2482
  %2507 = vst [vmem:[%s3 + $0x98] sm:$0xff] %v2483
  %2508 = vst [vmem:[%s3 + $0xa0] sm:$0xff] %v2484
  %2509 = vst [vmem:[%s3 + $0xa8] sm:$0xff] %v2485
  %2510 = vst [vmem:[%s3 + $0xb0] sm:$0xff] %v2486
  %2511 = vst [vmem:[%s3 + $0xb8] sm:$0xff] %v2487
  // Predicated region
  $region14: #{decoder_forward.1} parent=0 // pred_check
    _
  $region15: #{decoder_forward.1} parent=0 // pred_check_branch
    %2513 = sbr.rel (0) target = $region17
  $region16: #{decoder_forward.1} parent=0 // pred_region
    _
  $region17: #{decoder_forward.1} parent=0 // pred_fallthru
    _
  // Predicated region
  $region18: #{decoder_forward.1} parent=0 // pred_check
    _
  $region19: #{decoder_forward.1} parent=0 // pred_check_branch
    %2515 = sbr.rel (0) target = $region21
  $region20: #{decoder_forward.1} parent=0 // pred_region
    _
  $region21: #{decoder_forward.1} parent=0 // pred_fallthru
    _

</llo_original>
